<compile_context>
chip_gen: v7x
topology: tpu7x:2x2x1
jax: 0.10.0
libtpu: 0.0.40
codegen_flags: <defaults>
</compile_context>

<pallas_src>
import functools

import jax
import jax.numpy as jnp
from jax.experimental import pallas as pl
from jax.experimental.pallas import tpu as pltpu

LN_EPS = 1e-5   # torch.nn.LayerNorm default
PAD_N = 512     # pad node count to this multiple so tiles never fall to 128


def _round_up(n, m):
    return ((n + m - 1) // m) * m


def _pick_tile(n, target):
    """Largest multiple of 128 that divides n and is <= max(target, 128)."""
    best = 128
    t = 128
    cap = max(target, 128)
    while t <= min(cap, n):
        if n % t == 0:
            best = t
        t += 128
    return best


def _vmem_budget():
    """(scoped vmem limit, t-residency byte threshold) per TPU generation."""
    try:
        phys = pltpu.get_tpu_info().vmem_capacity_bytes
    except Exception:
        phys = 64 << 20                       # unknown -> assume v7x-sized VMEM
    if phys >= (96 << 20):                    # v5e / v6e: 128 MiB physical VMEM
        return 96 << 20, 24 << 20
    return 48 << 20, 12 << 20                 # v7x: 64 MiB physical VMEM


def _const_spec(block_shape, index_map):
    """BlockSpec for a block whose index never changes: single-buffer it."""
    try:
        return pl.BlockSpec(block_shape, index_map,
                            pipeline_mode=pl.Buffered(1))
    except Exception:  # jax without pipeline_mode/Buffered: default buffering
        return pl.BlockSpec(block_shape, index_map)


# ------------------------- Kernel 1: LN + ReLU + h @ W -------------------------
def ln_relu_linear_kernel(x_ref, w_ref, gamma_ref, beta_ref, t_ref):
    x = x_ref[...]                                            # (tm, H) f32
    mean = jnp.mean(x, axis=-1, keepdims=True)
    var = jnp.mean(jnp.square(x - mean), axis=-1, keepdims=True)
    h = (x - mean) * jax.lax.rsqrt(var + LN_EPS)
    h = h * gamma_ref[...] + beta_ref[...]                    # LayerNorm affine
    h = jnp.maximum(h, 0.0)                                   # ReLU
    # Dropout with p=0.0 (module default) is the identity.
    # TODO(synk): dropout with p>0 in training mode would need pltpu.prng_*.
    t_ref[...] = jnp.dot(h.astype(jnp.bfloat16), w_ref[...],  # bf16 x bf16 MXU
                         preferred_element_type=jnp.float32).astype(t_ref.dtype)


def ln_relu_linear(x, w_bf16, gamma, beta, *, tm=1024, out_dtype=jnp.bfloat16):
    N, H = x.shape
    tm = _pick_tile(N, tm)
    return pl.pallas_call(
        ln_relu_linear_kernel,
        out_shape=jax.ShapeDtypeStruct((N, H), out_dtype),    # bf16 t halves traffic
        grid_spec=pltpu.PrefetchScalarGridSpec(
            num_scalar_prefetch=0,
            grid=(N // tm,),
            in_specs=[
                pl.BlockSpec((tm, H), lambda i: (i, 0)),
                _const_spec((H, H), lambda i: (0, 0)),        # W (bf16), fetched once
                _const_spec((1, H), lambda i: (0, 0)),        # gamma
                _const_spec((1, H), lambda i: (0, 0)),        # beta
            ],
            out_specs=pl.BlockSpec((tm, H), lambda i: (i, 0)),
        ),
        compiler_params=pltpu.CompilerParams(
            dimension_semantics=("parallel",),
            vmem_limit_bytes=32 << 20),
    )(x, w_bf16, gamma, beta)


# --------------- Kernel 2: out = x + adj @ t + b (accumulate in out block) -----
def aggregate_residual_kernel(adj_ref, t_ref, x_ref, b_ref, out_ref, *,
                              tk, t_resident):
    # NOTE: out_ref[...] += across the k axis is only valid because the k grid
    # axis is LAST and "arbitrary" (output block stays resident across it).
    # Do not flip it to "parallel" or reorder the grid.
    k = pl.program_id(1)

    @pl.when(k == 0)
    def _():
        # Residual + bias initialize the resident f32 output block directly.
        out_ref[...] = x_ref[...] + b_ref[...]

    if t_resident:
        # Full t lives in VMEM (constant block index); slice the K chunk.
        start = pl.multiple_of(k * tk, 128)
        t_blk = t_ref[pl.ds(start, tk), :]
    else:
        t_blk = t_ref[...]

    out_ref[...] += jnp.dot(adj_ref[...], t_blk,
                            preferred_element_type=jnp.float32)


def aggregate_residual(adj, t, x, b, *, tm=1024, tk=1024):
    N, H = x.shape
    vmem_limit, t_resident_max = _vmem_budget()

    # Keep >=2 row tiles when possible so the parallel axis shards across the
    # two TensorCores on v7x; still a single big tile for tiny N.
    tm = _pick_tile(N, min(tm, max(128, N // 2)))
    tk = _pick_tile(N, tk)

    # Keep the whole t resident in VMEM when it fits the per-generation budget,
    # eliminating the (N/tm)-fold re-read of t from HBM.
    t_resident = (N * H * t.dtype.itemsize) <= t_resident_max
    if t_resident:
        t_spec = _const_spec((N, H), lambda i, k: (0, 0))
    else:
        t_spec = pl.BlockSpec((tk, H), lambda i, k: (k, 0))

    kernel = functools.partial(aggregate_residual_kernel,
                               tk=tk, t_resident=t_resident)
    return pl.pallas_call(
        kernel,
        out_shape=jax.ShapeDtypeStruct((N, H), jnp.float32),
        grid_spec=pltpu.PrefetchScalarGridSpec(
            num_scalar_prefetch=0,
            grid=(N // tm, N // tk),
            in_specs=[
                pl.BlockSpec((tm, tk), lambda i, k: (i, k)),   # adj tile (bf16)
                t_spec,                                        # t (bf16)
                pl.BlockSpec((tm, H), lambda i, k: (i, 0)),    # residual x (const in k)
                _const_spec((1, H), lambda i, k: (0, 0)),      # bias
            ],
            out_specs=pl.BlockSpec((tm, H), lambda i, k: (i, 0)),
        ),
        compiler_params=pltpu.CompilerParams(
            dimension_semantics=("parallel", "arbitrary"),
            vmem_limit_bytes=vmem_limit),
    )(adj, t, x, b)


# -------------------------------- DeepGCNLayer --------------------------------
def deep_gcn_layer_res_plus(x, adj, w, b, gamma, beta):
    """block='res+': out = x + conv(dropout(act(norm(x)))), dropout p=0.

    `adj` and `w` should ideally be pre-cast to bf16 once by the caller (they
    are reused across every layer of the DeeperGCN stack); we cast here if not.
    """
    # TODO(synk): real ogbn-proteins uses a sparse/segmented edge aggregation
    # (scalar-prefetched neighbor offsets); dense N x N adjacency is a stand-in.
    # TODO(synk): quantize adj further (fp8 on v7x, int8+per-row-scale dequant
    # on v5e/v6e) to halve the dominant HBM stream of kernel 2 again.
    N, H = x.shape
    assert H % 128 == 0, (
        "feature dim must be a multiple of 128 (lane width); pad before calling"
    )  # TODO(synk): masked LayerNorm to support H < 128 (default hidden=64)
    if adj.dtype != jnp.bfloat16:
        adj = adj.astype(jnp.bfloat16)          # halve the dominant HBM stream
    if w.dtype != jnp.bfloat16:
        w = w.astype(jnp.bfloat16)              # native MXU operand dtype

    # Pad N up to a multiple of PAD_N so the tile pickers never fall back to
    # 128-wide tiles. Zero padding is exact: padded nodes produce nonzero t
    # rows (relu(beta)) through LayerNorm, but the padded adjacency COLUMNS are
    # zero, so they contribute nothing, and padded output rows are sliced off.
    # Callers must NOT hand in a pre-padded adj with nonzero padding.
    N_pad = _round_up(N, PAD_N)
    if N_pad != N:
        x = jnp.pad(x, ((0, N_pad - N), (0, 0)))
        adj = jnp.pad(adj, ((0, N_pad - N), (0, N_pad - N)))

    t = ln_relu_linear(x, w, gamma, beta)       # bf16 [N_pad, H]
    out = aggregate_residual(adj, t, x, b)      # f32  [N_pad, H]
    return out[:N] if N_pad != N else out


def deep_gcn_layer_ref(x, adj, w, b, gamma, beta):
    """Pure-JAX reference with matching bf16 quantization, f32 accumulation."""
    mean = jnp.mean(x, axis=-1, keepdims=True)
    var = jnp.mean(jnp.square(x - mean), axis=-1, keepdims=True)
    h = (x - mean) * jax.lax.rsqrt(var + LN_EPS) * gamma + beta
    h = jnp.maximum(h, 0.0)
    t = jnp.dot(h.astype(jnp.bfloat16), w.astype(jnp.bfloat16),
                preferred_element_type=jnp.float32).astype(jnp.bfloat16)
    agg = jnp.dot(adj.astype(jnp.bfloat16), t,
                  preferred_element_type=jnp.float32)
    return x + agg + b


if __name__ == "__main__":
    N, H = 256, 128  # nodes, hidden channels (small, TPU-tile aligned)

    key = jax.random.PRNGKey(0)
    kx, ka, kw, kb = jax.random.split(key, 4)

    x = jax.random.normal(kx, (N, H), dtype=jnp.float32)
    # Dense "normalized adjacency" stand-in (row-stochastic-ish, deterministic).
    adj_raw = jax.random.uniform(ka, (N, N), dtype=jnp.float32)
    adj = adj_raw / jnp.sum(adj_raw, axis=-1, keepdims=True)
    adj_bf16 = adj.astype(jnp.bfloat16)         # cast ONCE, reused across layers
    w = jax.random.normal(kw, (H, H), dtype=jnp.float32) * (1.0 / jnp.sqrt(H))
    w_bf16 = w.astype(jnp.bfloat16)             # cast ONCE, reused across calls
    b = jax.random.normal(kb, (1, H), dtype=jnp.float32) * 0.01
    gamma = jnp.ones((1, H), dtype=jnp.float32)
    beta = jnp.zeros((1, H), dtype=jnp.float32)

    out = deep_gcn_layer_res_plus(x, adj_bf16, w_bf16, b, gamma, beta)
    out = jax.block_until_ready(out)

    ref = deep_gcn_layer_ref(x, adj, w, b, gamma, beta)
    assert out.shape == (N, H) and out.dtype == jnp.float32
    assert jnp.allclose(out, ref, atol=5e-2, rtol=5e-2), "mismatch vs reference"

    print("KERNEL_OK")
</pallas_src>

<mosaic_0001>
module attributes {stable_mosaic.version = 11 : i64} {
  func.func @ln_relu_linear_kernel(%arg0: i32, %arg1: memref<512x128xf32, #tpu.memory_space<vmem>>, %arg2: memref<128x128xbf16, #tpu.memory_space<vmem>>, %arg3: memref<1x128xf32, #tpu.memory_space<vmem>>, %arg4: memref<1x128xf32, #tpu.memory_space<vmem>>, %arg5: memref<512x128xbf16, #tpu.memory_space<vmem>>) attributes {dimension_semantics = [#tpu.dimension_semantics<parallel>], iteration_bounds = array<i64: 1>, scalar_prefetch = 0 : i64, scratch_operands = 0 : i64, tpu.core_type = #tpu.core_type<tc>, window_params = [{transform_indices = @transform_0, window_bounds = array<i64: 512, 128>}, {pipeline_mode = #tpu.pipeline_mode<synchronous>, transform_indices = @transform_1, window_bounds = array<i64: 128, 128>}, {pipeline_mode = #tpu.pipeline_mode<synchronous>, transform_indices = @transform_2, window_bounds = array<i64: 1, 128>}, {pipeline_mode = #tpu.pipeline_mode<synchronous>, transform_indices = @transform_3, window_bounds = array<i64: 1, 128>}, {transform_indices = @transform_4, window_bounds = array<i64: 512, 128>}]} {
    %c0 = arith.constant 0 : index
    %c0_0 = arith.constant 0 : index
    %0 = vector.load %arg1[%c0, %c0_0] : memref<512x128xf32, #tpu.memory_space<vmem>>, vector<512x128xf32>
    %cst = arith.constant dense<0.000000e+00> : vector<512xf32>
    %1 = vector.multi_reduction <add>, %0, %cst [1] : vector<512x128xf32> to vector<512xf32>
    %2 = vector.shape_cast %1 : vector<512xf32> to vector<512x1xf32>
    %cst_1 = arith.constant 1.280000e+02 : f32
    %3 = vector.broadcast %cst_1 : f32 to vector<512x1xf32>
    %4 = arith.divf %2, %3 : vector<512x1xf32>
    %5 = vector.broadcast %4 : vector<512x1xf32> to vector<512x128xf32>
    %6 = arith.subf %0, %5 : vector<512x128xf32>
    %7 = arith.mulf %6, %6 : vector<512x128xf32>
    %cst_2 = arith.constant dense<0.000000e+00> : vector<512xf32>
    %8 = vector.multi_reduction <add>, %7, %cst_2 [1] : vector<512x128xf32> to vector<512xf32>
    %9 = vector.shape_cast %8 : vector<512xf32> to vector<512x1xf32>
    %cst_3 = arith.constant 1.280000e+02 : f32
    %10 = vector.broadcast %cst_3 : f32 to vector<512x1xf32>
    %11 = arith.divf %9, %10 : vector<512x1xf32>
    %12 = vector.broadcast %4 : vector<512x1xf32> to vector<512x128xf32>
    %13 = arith.subf %0, %12 : vector<512x128xf32>
    %cst_4 = arith.constant 9.99999974E-6 : f32
    %14 = vector.broadcast %cst_4 : f32 to vector<512x1xf32>
    %15 = arith.addf %11, %14 : vector<512x1xf32>
    %16 = math.rsqrt %15 : vector<512x1xf32>
    %17 = vector.broadcast %16 : vector<512x1xf32> to vector<512x128xf32>
    %18 = arith.mulf %13, %17 : vector<512x128xf32>
    %c0_5 = arith.constant 0 : index
    %c0_6 = arith.constant 0 : index
    %19 = vector.load %arg3[%c0_5, %c0_6] : memref<1x128xf32, #tpu.memory_space<vmem>>, vector<1x128xf32>
    %20 = vector.broadcast %19 : vector<1x128xf32> to vector<512x128xf32>
    %21 = arith.mulf %18, %20 : vector<512x128xf32>
    %c0_7 = arith.constant 0 : index
    %c0_8 = arith.constant 0 : index
    %22 = vector.load %arg4[%c0_7, %c0_8] : memref<1x128xf32, #tpu.memory_space<vmem>>, vector<1x128xf32>
    %23 = vector.broadcast %22 : vector<1x128xf32> to vector<512x128xf32>
    %24 = arith.addf %21, %23 : vector<512x128xf32>
    %cst_9 = arith.constant 0.000000e+00 : f32
    %25 = vector.broadcast %cst_9 : f32 to vector<512x128xf32>
    %26 = arith.maximumf %24, %25 : vector<512x128xf32>
    %27 = arith.truncf %26 : vector<512x128xf32> to vector<512x128xbf16>
    %c0_10 = arith.constant 0 : index
    %c0_11 = arith.constant 0 : index
    %28 = vector.load %arg2[%c0_10, %c0_11] : memref<128x128xbf16, #tpu.memory_space<vmem>>, vector<128x128xbf16>
    %cst_12 = arith.constant dense<0.000000e+00> : vector<512x128xf32>
    %29 = tpu.matmul %27, %28, %cst_12 {dimension_numbers = #tpu.dot_dimension_numbers<[1], [0], [0], [1], [0, 0, 1, 1], [], []>} : vector<512x128xbf16>, vector<128x128xbf16>, vector<512x128xf32> -> vector<512x128xf32>
    %30 = arith.truncf %29 : vector<512x128xf32> to vector<512x128xbf16>
    %c0_13 = arith.constant 0 : index
    %c0_14 = arith.constant 0 : index
    %31 = vector.load %arg5[%c0_13, %c0_14] : memref<512x128xbf16, #tpu.memory_space<vmem>>, vector<512x128xbf16>
    tpu.vector_store %arg5[%c0_13, %c0_14], %30 {strides = array<i32>} : memref<512x128xbf16, #tpu.memory_space<vmem>>, vector<512x128xbf16>,
    return
  }
  func.func @transform_0(%arg0: i32) -> (i32, i32) {
    %c0_i32 = arith.constant 0 : i32
    %c0_i32_0 = arith.constant 0 : i32
    return %arg0, %c0_i32 : i32, i32
  }
  func.func @transform_1(%arg0: i32) -> (i32, i32) {
    %c0_i32 = arith.constant 0 : i32
    %c0_i32_0 = arith.constant 0 : i32
    %c0_i32_1 = arith.constant 0 : i32
    return %c0_i32, %c0_i32_0 : i32, i32
  }
  func.func @transform_2(%arg0: i32) -> (i32, i32) {
    %c0_i32 = arith.constant 0 : i32
    %c0_i32_0 = arith.constant 0 : i32
    %c0_i32_1 = arith.constant 0 : i32
    return %c0_i32, %c0_i32_0 : i32, i32
  }
  func.func @transform_3(%arg0: i32) -> (i32, i32) {
    %c0_i32 = arith.constant 0 : i32
    %c0_i32_0 = arith.constant 0 : i32
    %c0_i32_1 = arith.constant 0 : i32
    return %c0_i32, %c0_i32_0 : i32, i32
  }
  func.func @transform_4(%arg0: i32) -> (i32, i32) {
    %c0_i32 = arith.constant 0 : i32
    %c0_i32_0 = arith.constant 0 : i32
    return %arg0, %c0_i32 : i32, i32
  }
}

</mosaic_0001>

<llo_original>
// kernel: tpu_custom_call.1
$region0: #{tpu_custom_call.1}
  #allocation0 [shape = 'u32[]', space=smem, size = 0x4, offset = 0x4, fixed_abs, tag = 'smem constant byte address 0x4 - core index']
  #allocation1 [shape = 'u32[144,128]{1,0:T(1,128)}', space=vmem, size = 0x12000, scoped, tag = 'internal scratch']
  %s0 = inlined_call_operand.hbm [shape: f32[512,128], index: 0, kind: input, shape index: {}]
  %s1 = inlined_call_operand.hbm [shape: bf16[128,128], index: 1, kind: input, shape index: {}]
  %s2 = inlined_call_operand.vmem [shape: f32[1,128], index: 2, kind: input, shape index: {}]
  %s3 = inlined_call_operand.vmem [shape: f32[1,128], index: 3, kind: input, shape index: {}]
  %s4 = inlined_call_operand.hbm [shape: bf16[512,128], index: 4, kind: output, shape index: {}]
  %s5 = sld [smem:[#allocation0]]
  $region34: #{tpu_custom_call.1} parent=0
    _
  %s7 = ssub.s32 1, %s5
  %s8 = scalar_select 0, %s7, %s5
  $region1: #{tpu_custom_call.1} parent=0
    #allocation2 [shape = 'u8[262144]{0}', space=vmem, size = 0x40000, scoped, tag = 'input window, operand 0, single buffered']
    #allocation3 [shape = 's32[1]{0}', space=sflag, size = 0x4, scoped, tag = 'scoped memory for tpu_custom_call.1']
    #allocation4 [shape = 's32[1]{0}', space=sflag, size = 0x4, scoped, tag = 'scoped memory for tpu_custom_call.1']
    #allocation5 [shape = 'u8[32768]{0}', space=vmem, size = 0x8000, scoped, tag = 'input window, operand 1, single buffered']
    #allocation6 [shape = 's32[1]{0}', space=sflag, size = 0x4, scoped, tag = 'scoped memory for tpu_custom_call.1']
    #allocation7 [shape = 'u8[131072]{0}', space=vmem, size = 0x20000, scoped, tag = 'output window, operand 0, single buffered']
    %9 = vsyncpa [#allocation3], 0
    %10 = vsyncpa [#allocation6], 0
    %11 = vsyncpa [#allocation4], 0
    // Predicated region
    $region2: #{tpu_custom_call.1} parent=1 // pred_check
      _
    $region3: #{tpu_custom_call.1} parent=1 // pred_check_branch
      %13 = sbr.rel (0) target = $region5
    $region4: #{tpu_custom_call.1} parent=1 // pred_region
      %s15 = ssub.s32 8192, 8192
      %16 = vsyncadd [#allocation3], %s15
      %s17 = sshll.u32 [#allocation2], 4
      %s18 = int_to_ptr.vmem [resolvable:$true] %s17
      %23 = dma.hbm_to_vmem [thread:$0]  %s0, 8192, %s18, [#allocation3], 128, 128, 8
    $region5: #{tpu_custom_call.1} parent=1 // pred_fallthru
      _
    // Predicated region
    $region6: #{tpu_custom_call.1} parent=1 // pred_check
      _
    $region7: #{tpu_custom_call.1} parent=1 // pred_check_branch
      %25 = sbr.rel (0) target = $region9
    $region8: #{tpu_custom_call.1} parent=1 // pred_region
      %s27 = ssub.s32 1024, 1024
      %28 = vsyncadd [#allocation6], %s27
      %s29 = sshll.u32 [#allocation5], 4
      %s30 = int_to_ptr.vmem [resolvable:$true] %s29
      %35 = dma.hbm_to_vmem [thread:$0]  %s1, 1024, %s30, [#allocation6], 64, 64, 4
    $region9: #{tpu_custom_call.1} parent=1 // pred_fallthru
      _
    // Predicated region
    $region10: #{tpu_custom_call.1} parent=1 // pred_check
      _
    $region11: #{tpu_custom_call.1} parent=1 // pred_check_branch
      %37 = sbr.rel (0) target = $region13
    $region12: #{tpu_custom_call.1} parent=1 // pred_region
      _
    $region13: #{tpu_custom_call.1} parent=1 // pred_fallthru
      _
    // Predicated region
    $region14: #{tpu_custom_call.1} parent=1 // pred_check
      _
    $region15: #{tpu_custom_call.1} parent=1 // pred_check_branch
      %39 = sbr.rel (0) target = $region17
    $region16: #{tpu_custom_call.1} parent=1 // pred_region
      _
    $region17: #{tpu_custom_call.1} parent=1 // pred_fallthru
      _
    // Predicated region
    $region18: #{tpu_custom_call.1} parent=1 // pred_check
      _
    $region19: #{tpu_custom_call.1} parent=1 // pred_check_branch
      %41 = sbr.rel (0) target = $region21
    $region20: #{tpu_custom_call.1} parent=1 // pred_region
      %42 = dma.done [#allocation3], 8192
    $region21: #{tpu_custom_call.1} parent=1 // pred_fallthru
      _
    // Predicated region
    $region22: #{tpu_custom_call.1} parent=1 // pred_check
      _
    $region23: #{tpu_custom_call.1} parent=1 // pred_check_branch
      %44 = sbr.rel (0) target = $region25
    $region24: #{tpu_custom_call.1} parent=1 // pred_region
      %45 = dma.done [#allocation6], 1024
    $region25: #{tpu_custom_call.1} parent=1 // pred_fallthru
      _
    %v47 = vld [vmem:[#allocation2] sm:$0xff]
    %v48 = vld [vmem:[#allocation2 + $0x8] sm:$0xff]
    %v49 = vld [vmem:[#allocation2 + $0x10] sm:$0xff]
    %v50 = vld [vmem:[#allocation2 + $0x18] sm:$0xff]
    %v51 = vld [vmem:[#allocation2 + $0x20] sm:$0xff]
    %v52 = vld [vmem:[#allocation2 + $0x28] sm:$0xff]
    %v53 = vld [vmem:[#allocation2 + $0x30] sm:$0xff]
    %v54 = vld [vmem:[#allocation2 + $0x38] sm:$0xff]
    %v55 = vld [vmem:[#allocation2 + $0x40] sm:$0xff]
    %v56 = vld [vmem:[#allocation2 + $0x48] sm:$0xff]
    %v57 = vld [vmem:[#allocation2 + $0x50] sm:$0xff]
    %v58 = vld [vmem:[#allocation2 + $0x58] sm:$0xff]
    %v59 = vld [vmem:[#allocation2 + $0x60] sm:$0xff]
    %v60 = vld [vmem:[#allocation2 + $0x68] sm:$0xff]
    %v61 = vld [vmem:[#allocation2 + $0x70] sm:$0xff]
    %v62 = vld [vmem:[#allocation2 + $0x78] sm:$0xff]
    %v63 = vld [vmem:[#allocation2 + $0x80] sm:$0xff]
    %v64 = vld [vmem:[#allocation2 + $0x88] sm:$0xff]
    %v65 = vld [vmem:[#allocation2 + $0x90] sm:$0xff]
    %v66 = vld [vmem:[#allocation2 + $0x98] sm:$0xff]
    %v67 = vld [vmem:[#allocation2 + $0xa0] sm:$0xff]
    %v68 = vld [vmem:[#allocation2 + $0xa8] sm:$0xff]
    %v69 = vld [vmem:[#allocation2 + $0xb0] sm:$0xff]
    %v70 = vld [vmem:[#allocation2 + $0xb8] sm:$0xff]
    %v71 = vld [vmem:[#allocation2 + $0xc0] sm:$0xff]
    %v72 = vld [vmem:[#allocation2 + $0xc8] sm:$0xff]
    %v73 = vld [vmem:[#allocation2 + $0xd0] sm:$0xff]
    %v74 = vld [vmem:[#allocation2 + $0xd8] sm:$0xff]
    %v75 = vld [vmem:[#allocation2 + $0xe0] sm:$0xff]
    %v76 = vld [vmem:[#allocation2 + $0xe8] sm:$0xff]
    %v77 = vld [vmem:[#allocation2 + $0xf0] sm:$0xff]
    %v78 = vld [vmem:[#allocation2 + $0xf8] sm:$0xff]
    %v79 = vld [vmem:[#allocation2 + $0x100] sm:$0xff]
    %v80 = vld [vmem:[#allocation2 + $0x108] sm:$0xff]
    %v81 = vld [vmem:[#allocation2 + $0x110] sm:$0xff]
    %v82 = vld [vmem:[#allocation2 + $0x118] sm:$0xff]
    %v83 = vld [vmem:[#allocation2 + $0x120] sm:$0xff]
    %v84 = vld [vmem:[#allocation2 + $0x128] sm:$0xff]
    %v85 = vld [vmem:[#allocation2 + $0x130] sm:$0xff]
    %v86 = vld [vmem:[#allocation2 + $0x138] sm:$0xff]
    %v87 = vld [vmem:[#allocation2 + $0x140] sm:$0xff]
    %v88 = vld [vmem:[#allocation2 + $0x148] sm:$0xff]
    %v89 = vld [vmem:[#allocation2 + $0x150] sm:$0xff]
    %v90 = vld [vmem:[#allocation2 + $0x158] sm:$0xff]
    %v91 = vld [vmem:[#allocation2 + $0x160] sm:$0xff]
    %v92 = vld [vmem:[#allocation2 + $0x168] sm:$0xff]
    %v93 = vld [vmem:[#allocation2 + $0x170] sm:$0xff]
    %v94 = vld [vmem:[#allocation2 + $0x178] sm:$0xff]
    %v95 = vld [vmem:[#allocation2 + $0x180] sm:$0xff]
    %v96 = vld [vmem:[#allocation2 + $0x188] sm:$0xff]
    %v97 = vld [vmem:[#allocation2 + $0x190] sm:$0xff]
    %v98 = vld [vmem:[#allocation2 + $0x198] sm:$0xff]
    %v99 = vld [vmem:[#allocation2 + $0x1a0] sm:$0xff]
    %v100 = vld [vmem:[#allocation2 + $0x1a8] sm:$0xff]
    %v101 = vld [vmem:[#allocation2 + $0x1b0] sm:$0xff]
    %v102 = vld [vmem:[#allocation2 + $0x1b8] sm:$0xff]
    %v103 = vld [vmem:[#allocation2 + $0x1c0] sm:$0xff]
    %v104 = vld [vmem:[#allocation2 + $0x1c8] sm:$0xff]
    %v105 = vld [vmem:[#allocation2 + $0x1d0] sm:$0xff]
    %v106 = vld [vmem:[#allocation2 + $0x1d8] sm:$0xff]
    %v107 = vld [vmem:[#allocation2 + $0x1e0] sm:$0xff]
    %v108 = vld [vmem:[#allocation2 + $0x1e8] sm:$0xff]
    %v109 = vld [vmem:[#allocation2 + $0x1f0] sm:$0xff]
    %v110 = vld [vmem:[#allocation2 + $0x1f8] sm:$0xff]
    %111 = vadd.xlane.f32.xlu0 %v47
    %v112 = vpop.xlane.xlu0 %111
    %113 = vadd.xlane.f32.xlu0 %v48
    %v114 = vpop.xlane.xlu0 %113
    %115 = vadd.xlane.f32.xlu0 %v49
    %v116 = vpop.xlane.xlu0 %115
    %117 = vadd.xlane.f32.xlu0 %v50
    %v118 = vpop.xlane.xlu0 %117
    %119 = vadd.xlane.f32.xlu0 %v51
    %v120 = vpop.xlane.xlu0 %119
    %121 = vadd.xlane.f32.xlu0 %v52
    %v122 = vpop.xlane.xlu0 %121
    %123 = vadd.xlane.f32.xlu0 %v53
    %v124 = vpop.xlane.xlu0 %123
    %125 = vadd.xlane.f32.xlu0 %v54
    %v126 = vpop.xlane.xlu0 %125
    %127 = vadd.xlane.f32.xlu0 %v55
    %v128 = vpop.xlane.xlu0 %127
    %129 = vadd.xlane.f32.xlu0 %v56
    %v130 = vpop.xlane.xlu0 %129
    %131 = vadd.xlane.f32.xlu0 %v57
    %v132 = vpop.xlane.xlu0 %131
    %133 = vadd.xlane.f32.xlu0 %v58
    %v134 = vpop.xlane.xlu0 %133
    %135 = vadd.xlane.f32.xlu0 %v59
    %v136 = vpop.xlane.xlu0 %135
    %137 = vadd.xlane.f32.xlu0 %v60
    %v138 = vpop.xlane.xlu0 %137
    %139 = vadd.xlane.f32.xlu0 %v61
    %v140 = vpop.xlane.xlu0 %139
    %141 = vadd.xlane.f32.xlu0 %v62
    %v142 = vpop.xlane.xlu0 %141
    %143 = vadd.xlane.f32.xlu0 %v63
    %v144 = vpop.xlane.xlu0 %143
    %145 = vadd.xlane.f32.xlu0 %v64
    %v146 = vpop.xlane.xlu0 %145
    %147 = vadd.xlane.f32.xlu0 %v65
    %v148 = vpop.xlane.xlu0 %147
    %149 = vadd.xlane.f32.xlu0 %v66
    %v150 = vpop.xlane.xlu0 %149
    %151 = vadd.xlane.f32.xlu0 %v67
    %v152 = vpop.xlane.xlu0 %151
    %153 = vadd.xlane.f32.xlu0 %v68
    %v154 = vpop.xlane.xlu0 %153
    %155 = vadd.xlane.f32.xlu0 %v69
    %v156 = vpop.xlane.xlu0 %155
    %157 = vadd.xlane.f32.xlu0 %v70
    %v158 = vpop.xlane.xlu0 %157
    %159 = vadd.xlane.f32.xlu0 %v71
    %v160 = vpop.xlane.xlu0 %159
    %161 = vadd.xlane.f32.xlu0 %v72
    %v162 = vpop.xlane.xlu0 %161
    %163 = vadd.xlane.f32.xlu0 %v73
    %v164 = vpop.xlane.xlu0 %163
    %165 = vadd.xlane.f32.xlu0 %v74
    %v166 = vpop.xlane.xlu0 %165
    %167 = vadd.xlane.f32.xlu0 %v75
    %v168 = vpop.xlane.xlu0 %167
    %169 = vadd.xlane.f32.xlu0 %v76
    %v170 = vpop.xlane.xlu0 %169
    %171 = vadd.xlane.f32.xlu0 %v77
    %v172 = vpop.xlane.xlu0 %171
    %173 = vadd.xlane.f32.xlu0 %v78
    %v174 = vpop.xlane.xlu0 %173
    %175 = vadd.xlane.f32.xlu0 %v79
    %v176 = vpop.xlane.xlu0 %175
    %177 = vadd.xlane.f32.xlu0 %v80
    %v178 = vpop.xlane.xlu0 %177
    %179 = vadd.xlane.f32.xlu0 %v81
    %v180 = vpop.xlane.xlu0 %179
    %181 = vadd.xlane.f32.xlu0 %v82
    %v182 = vpop.xlane.xlu0 %181
    %183 = vadd.xlane.f32.xlu0 %v83
    %v184 = vpop.xlane.xlu0 %183
    %185 = vadd.xlane.f32.xlu0 %v84
    %v186 = vpop.xlane.xlu0 %185
    %187 = vadd.xlane.f32.xlu0 %v85
    %v188 = vpop.xlane.xlu0 %187
    %189 = vadd.xlane.f32.xlu0 %v86
    %v190 = vpop.xlane.xlu0 %189
    %191 = vadd.xlane.f32.xlu0 %v87
    %v192 = vpop.xlane.xlu0 %191
    %193 = vadd.xlane.f32.xlu0 %v88
    %v194 = vpop.xlane.xlu0 %193
    %195 = vadd.xlane.f32.xlu0 %v89
    %v196 = vpop.xlane.xlu0 %195
    %197 = vadd.xlane.f32.xlu0 %v90
    %v198 = vpop.xlane.xlu0 %197
    %199 = vadd.xlane.f32.xlu0 %v91
    %v200 = vpop.xlane.xlu0 %199
    %201 = vadd.xlane.f32.xlu0 %v92
    %v202 = vpop.xlane.xlu0 %201
    %203 = vadd.xlane.f32.xlu0 %v93
    %v204 = vpop.xlane.xlu0 %203
    %205 = vadd.xlane.f32.xlu0 %v94
    %v206 = vpop.xlane.xlu0 %205
    %207 = vadd.xlane.f32.xlu0 %v95
    %v208 = vpop.xlane.xlu0 %207
    %209 = vadd.xlane.f32.xlu0 %v96
    %v210 = vpop.xlane.xlu0 %209
    %211 = vadd.xlane.f32.xlu0 %v97
    %v212 = vpop.xlane.xlu0 %211
    %213 = vadd.xlane.f32.xlu0 %v98
    %v214 = vpop.xlane.xlu0 %213
    %215 = vadd.xlane.f32.xlu0 %v99
    %v216 = vpop.xlane.xlu0 %215
    %217 = vadd.xlane.f32.xlu0 %v100
    %v218 = vpop.xlane.xlu0 %217
    %219 = vadd.xlane.f32.xlu0 %v101
    %v220 = vpop.xlane.xlu0 %219
    %221 = vadd.xlane.f32.xlu0 %v102
    %v222 = vpop.xlane.xlu0 %221
    %223 = vadd.xlane.f32.xlu0 %v103
    %v224 = vpop.xlane.xlu0 %223
    %225 = vadd.xlane.f32.xlu0 %v104
    %v226 = vpop.xlane.xlu0 %225
    %227 = vadd.xlane.f32.xlu0 %v105
    %v228 = vpop.xlane.xlu0 %227
    %229 = vadd.xlane.f32.xlu0 %v106
    %v230 = vpop.xlane.xlu0 %229
    %231 = vadd.xlane.f32.xlu0 %v107
    %v232 = vpop.xlane.xlu0 %231
    %233 = vadd.xlane.f32.xlu0 %v108
    %v234 = vpop.xlane.xlu0 %233
    %235 = vadd.xlane.f32.xlu0 %v109
    %v236 = vpop.xlane.xlu0 %235
    %237 = vadd.xlane.f32.xlu0 %v110
    %v238 = vpop.xlane.xlu0 %237
    %v239 = vrcp.pop 128.0
    %v240 = vmul.f32 %v112, %v239
    %v241 = vmul.f32 %v114, %v239
    %v242 = vmul.f32 %v116, %v239
    %v243 = vmul.f32 %v118, %v239
    %v244 = vmul.f32 %v120, %v239
    %v245 = vmul.f32 %v122, %v239
    %v246 = vmul.f32 %v124, %v239
    %v247 = vmul.f32 %v126, %v239
    %v248 = vmul.f32 %v128, %v239
    %v249 = vmul.f32 %v130, %v239
    %v250 = vmul.f32 %v132, %v239
    %v251 = vmul.f32 %v134, %v239
    %v252 = vmul.f32 %v136, %v239
    %v253 = vmul.f32 %v138, %v239
    %v254 = vmul.f32 %v140, %v239
    %v255 = vmul.f32 %v142, %v239
    %v256 = vmul.f32 %v144, %v239
    %v257 = vmul.f32 %v146, %v239
    %v258 = vmul.f32 %v148, %v239
    %v259 = vmul.f32 %v150, %v239
    %v260 = vmul.f32 %v152, %v239
    %v261 = vmul.f32 %v154, %v239
    %v262 = vmul.f32 %v156, %v239
    %v263 = vmul.f32 %v158, %v239
    %v264 = vmul.f32 %v160, %v239
    %v265 = vmul.f32 %v162, %v239
    %v266 = vmul.f32 %v164, %v239
    %v267 = vmul.f32 %v166, %v239
    %v268 = vmul.f32 %v168, %v239
    %v269 = vmul.f32 %v170, %v239
    %v270 = vmul.f32 %v172, %v239
    %v271 = vmul.f32 %v174, %v239
    %v272 = vmul.f32 %v176, %v239
    %v273 = vmul.f32 %v178, %v239
    %v274 = vmul.f32 %v180, %v239
    %v275 = vmul.f32 %v182, %v239
    %v276 = vmul.f32 %v184, %v239
    %v277 = vmul.f32 %v186, %v239
    %v278 = vmul.f32 %v188, %v239
    %v279 = vmul.f32 %v190, %v239
    %v280 = vmul.f32 %v192, %v239
    %v281 = vmul.f32 %v194, %v239
    %v282 = vmul.f32 %v196, %v239
    %v283 = vmul.f32 %v198, %v239
    %v284 = vmul.f32 %v200, %v239
    %v285 = vmul.f32 %v202, %v239
    %v286 = vmul.f32 %v204, %v239
    %v287 = vmul.f32 %v206, %v239
    %v288 = vmul.f32 %v208, %v239
    %v289 = vmul.f32 %v210, %v239
    %v290 = vmul.f32 %v212, %v239
    %v291 = vmul.f32 %v214, %v239
    %v292 = vmul.f32 %v216, %v239
    %v293 = vmul.f32 %v218, %v239
    %v294 = vmul.f32 %v220, %v239
    %v295 = vmul.f32 %v222, %v239
    %v296 = vmul.f32 %v224, %v239
    %v297 = vmul.f32 %v226, %v239
    %v298 = vmul.f32 %v228, %v239
    %v299 = vmul.f32 %v230, %v239
    %v300 = vmul.f32 %v232, %v239
    %v301 = vmul.f32 %v234, %v239
    %v302 = vmul.f32 %v236, %v239
    %v303 = vmul.f32 %v238, %v239
    %v304 = vsub.f32 %v47, %v240
    %v305 = vsub.f32 %v48, %v241
    %v306 = vsub.f32 %v49, %v242
    %v307 = vsub.f32 %v50, %v243
    %v308 = vsub.f32 %v51, %v244
    %v309 = vsub.f32 %v52, %v245
    %v310 = vsub.f32 %v53, %v246
    %v311 = vsub.f32 %v54, %v247
    %v312 = vsub.f32 %v55, %v248
    %v313 = vsub.f32 %v56, %v249
    %v314 = vsub.f32 %v57, %v250
    %v315 = vsub.f32 %v58, %v251
    %v316 = vsub.f32 %v59, %v252
    %v317 = vsub.f32 %v60, %v253
    %v318 = vsub.f32 %v61, %v254
    %v319 = vsub.f32 %v62, %v255
    %v320 = vsub.f32 %v63, %v256
    %v321 = vsub.f32 %v64, %v257
    %v322 = vsub.f32 %v65, %v258
    %v323 = vsub.f32 %v66, %v259
    %v324 = vsub.f32 %v67, %v260
    %v325 = vsub.f32 %v68, %v261
    %v326 = vsub.f32 %v69, %v262
    %v327 = vsub.f32 %v70, %v263
    %v328 = vsub.f32 %v71, %v264
    %v329 = vsub.f32 %v72, %v265
    %v330 = vsub.f32 %v73, %v266
    %v331 = vsub.f32 %v74, %v267
    %v332 = vsub.f32 %v75, %v268
    %v333 = vsub.f32 %v76, %v269
    %v334 = vsub.f32 %v77, %v270
    %v335 = vsub.f32 %v78, %v271
    %v336 = vsub.f32 %v79, %v272
    %v337 = vsub.f32 %v80, %v273
    %v338 = vsub.f32 %v81, %v274
    %v339 = vsub.f32 %v82, %v275
    %v340 = vsub.f32 %v83, %v276
    %v341 = vsub.f32 %v84, %v277
    %v342 = vsub.f32 %v85, %v278
    %v343 = vsub.f32 %v86, %v279
    %v344 = vsub.f32 %v87, %v280
    %v345 = vsub.f32 %v88, %v281
    %v346 = vsub.f32 %v89, %v282
    %v347 = vsub.f32 %v90, %v283
    %v348 = vsub.f32 %v91, %v284
    %v349 = vsub.f32 %v92, %v285
    %v350 = vsub.f32 %v93, %v286
    %v351 = vsub.f32 %v94, %v287
    %v352 = vsub.f32 %v95, %v288
    %v353 = vsub.f32 %v96, %v289
    %v354 = vsub.f32 %v97, %v290
    %v355 = vsub.f32 %v98, %v291
    %v356 = vsub.f32 %v99, %v292
    %v357 = vsub.f32 %v100, %v293
    %v358 = vsub.f32 %v101, %v294
    %v359 = vsub.f32 %v102, %v295
    %v360 = vsub.f32 %v103, %v296
    %v361 = vsub.f32 %v104, %v297
    %v362 = vsub.f32 %v105, %v298
    %v363 = vsub.f32 %v106, %v299
    %v364 = vsub.f32 %v107, %v300
    %v365 = vsub.f32 %v108, %v301
    %v366 = vsub.f32 %v109, %v302
    %v367 = vsub.f32 %v110, %v303
    %v368 = vmul.f32 %v304, %v304
    %v369 = vmul.f32 %v305, %v305
    %v370 = vmul.f32 %v306, %v306
    %v371 = vmul.f32 %v307, %v307
    %v372 = vmul.f32 %v308, %v308
    %v373 = vmul.f32 %v309, %v309
    %v374 = vmul.f32 %v310, %v310
    %v375 = vmul.f32 %v311, %v311
    %v376 = vmul.f32 %v312, %v312
    %v377 = vmul.f32 %v313, %v313
    %v378 = vmul.f32 %v314, %v314
    %v379 = vmul.f32 %v315, %v315
    %v380 = vmul.f32 %v316, %v316
    %v381 = vmul.f32 %v317, %v317
    %v382 = vmul.f32 %v318, %v318
    %v383 = vmul.f32 %v319, %v319
    %v384 = vmul.f32 %v320, %v320
    %v385 = vmul.f32 %v321, %v321
    %v386 = vmul.f32 %v322, %v322
    %v387 = vmul.f32 %v323, %v323
    %v388 = vmul.f32 %v324, %v324
    %v389 = vmul.f32 %v325, %v325
    %v390 = vmul.f32 %v326, %v326
    %v391 = vmul.f32 %v327, %v327
    %v392 = vmul.f32 %v328, %v328
    %v393 = vmul.f32 %v329, %v329
    %v394 = vmul.f32 %v330, %v330
    %v395 = vmul.f32 %v331, %v331
    %v396 = vmul.f32 %v332, %v332
    %v397 = vmul.f32 %v333, %v333
    %v398 = vmul.f32 %v334, %v334
    %v399 = vmul.f32 %v335, %v335
    %v400 = vmul.f32 %v336, %v336
    %v401 = vmul.f32 %v337, %v337
    %v402 = vmul.f32 %v338, %v338
    %v403 = vmul.f32 %v339, %v339
    %v404 = vmul.f32 %v340, %v340
    %v405 = vmul.f32 %v341, %v341
    %v406 = vmul.f32 %v342, %v342
    %v407 = vmul.f32 %v343, %v343
    %v408 = vmul.f32 %v344, %v344
    %v409 = vmul.f32 %v345, %v345
    %v410 = vmul.f32 %v346, %v346
    %v411 = vmul.f32 %v347, %v347
    %v412 = vmul.f32 %v348, %v348
    %v413 = vmul.f32 %v349, %v349
    %v414 = vmul.f32 %v350, %v350
    %v415 = vmul.f32 %v351, %v351
    %v416 = vmul.f32 %v352, %v352
    %v417 = vmul.f32 %v353, %v353
    %v418 = vmul.f32 %v354, %v354
    %v419 = vmul.f32 %v355, %v355
    %v420 = vmul.f32 %v356, %v356
    %v421 = vmul.f32 %v357, %v357
    %v422 = vmul.f32 %v358, %v358
    %v423 = vmul.f32 %v359, %v359
    %v424 = vmul.f32 %v360, %v360
    %v425 = vmul.f32 %v361, %v361
    %v426 = vmul.f32 %v362, %v362
    %v427 = vmul.f32 %v363, %v363
    %v428 = vmul.f32 %v364, %v364
    %v429 = vmul.f32 %v365, %v365
    %v430 = vmul.f32 %v366, %v366
    %v431 = vmul.f32 %v367, %v367
    %432 = vadd.xlane.f32.xlu0 %v368
    %v433 = vpop.xlane.xlu0 %432
    %434 = vadd.xlane.f32.xlu0 %v369
    %v435 = vpop.xlane.xlu0 %434
    %436 = vadd.xlane.f32.xlu0 %v370
    %v437 = vpop.xlane.xlu0 %436
    %438 = vadd.xlane.f32.xlu0 %v371
    %v439 = vpop.xlane.xlu0 %438
    %440 = vadd.xlane.f32.xlu0 %v372
    %v441 = vpop.xlane.xlu0 %440
    %442 = vadd.xlane.f32.xlu0 %v373
    %v443 = vpop.xlane.xlu0 %442
    %444 = vadd.xlane.f32.xlu0 %v374
    %v445 = vpop.xlane.xlu0 %444
    %446 = vadd.xlane.f32.xlu0 %v375
    %v447 = vpop.xlane.xlu0 %446
    %448 = vadd.xlane.f32.xlu0 %v376
    %v449 = vpop.xlane.xlu0 %448
    %450 = vadd.xlane.f32.xlu0 %v377
    %v451 = vpop.xlane.xlu0 %450
    %452 = vadd.xlane.f32.xlu0 %v378
    %v453 = vpop.xlane.xlu0 %452
    %454 = vadd.xlane.f32.xlu0 %v379
    %v455 = vpop.xlane.xlu0 %454
    %456 = vadd.xlane.f32.xlu0 %v380
    %v457 = vpop.xlane.xlu0 %456
    %458 = vadd.xlane.f32.xlu0 %v381
    %v459 = vpop.xlane.xlu0 %458
    %460 = vadd.xlane.f32.xlu0 %v382
    %v461 = vpop.xlane.xlu0 %460
    %462 = vadd.xlane.f32.xlu0 %v383
    %v463 = vpop.xlane.xlu0 %462
    %464 = vadd.xlane.f32.xlu0 %v384
    %v465 = vpop.xlane.xlu0 %464
    %466 = vadd.xlane.f32.xlu0 %v385
    %v467 = vpop.xlane.xlu0 %466
    %468 = vadd.xlane.f32.xlu0 %v386
    %v469 = vpop.xlane.xlu0 %468
    %470 = vadd.xlane.f32.xlu0 %v387
    %v471 = vpop.xlane.xlu0 %470
    %472 = vadd.xlane.f32.xlu0 %v388
    %v473 = vpop.xlane.xlu0 %472
    %474 = vadd.xlane.f32.xlu0 %v389
    %v475 = vpop.xlane.xlu0 %474
    %476 = vadd.xlane.f32.xlu0 %v390
    %v477 = vpop.xlane.xlu0 %476
    %478 = vadd.xlane.f32.xlu0 %v391
    %v479 = vpop.xlane.xlu0 %478
    %480 = vadd.xlane.f32.xlu0 %v392
    %v481 = vpop.xlane.xlu0 %480
    %482 = vadd.xlane.f32.xlu0 %v393
    %v483 = vpop.xlane.xlu0 %482
    %484 = vadd.xlane.f32.xlu0 %v394
    %v485 = vpop.xlane.xlu0 %484
    %486 = vadd.xlane.f32.xlu0 %v395
    %v487 = vpop.xlane.xlu0 %486
    %488 = vadd.xlane.f32.xlu0 %v396
    %v489 = vpop.xlane.xlu0 %488
    %490 = vadd.xlane.f32.xlu0 %v397
    %v491 = vpop.xlane.xlu0 %490
    %492 = vadd.xlane.f32.xlu0 %v398
    %v493 = vpop.xlane.xlu0 %492
    %494 = vadd.xlane.f32.xlu0 %v399
    %v495 = vpop.xlane.xlu0 %494
    %496 = vadd.xlane.f32.xlu0 %v400
    %v497 = vpop.xlane.xlu0 %496
    %498 = vadd.xlane.f32.xlu0 %v401
    %v499 = vpop.xlane.xlu0 %498
    %500 = vadd.xlane.f32.xlu0 %v402
    %v501 = vpop.xlane.xlu0 %500
    %502 = vadd.xlane.f32.xlu0 %v403
    %v503 = vpop.xlane.xlu0 %502
    %504 = vadd.xlane.f32.xlu0 %v404
    %v505 = vpop.xlane.xlu0 %504
    %506 = vadd.xlane.f32.xlu0 %v405
    %v507 = vpop.xlane.xlu0 %506
    %508 = vadd.xlane.f32.xlu0 %v406
    %v509 = vpop.xlane.xlu0 %508
    %510 = vadd.xlane.f32.xlu0 %v407
    %v511 = vpop.xlane.xlu0 %510
    %512 = vadd.xlane.f32.xlu0 %v408
    %v513 = vpop.xlane.xlu0 %512
    %514 = vadd.xlane.f32.xlu0 %v409
    %v515 = vpop.xlane.xlu0 %514
    %516 = vadd.xlane.f32.xlu0 %v410
    %v517 = vpop.xlane.xlu0 %516
    %518 = vadd.xlane.f32.xlu0 %v411
    %v519 = vpop.xlane.xlu0 %518
    %520 = vadd.xlane.f32.xlu0 %v412
    %v521 = vpop.xlane.xlu0 %520
    %522 = vadd.xlane.f32.xlu0 %v413
    %v523 = vpop.xlane.xlu0 %522
    %524 = vadd.xlane.f32.xlu0 %v414
    %v525 = vpop.xlane.xlu0 %524
    %526 = vadd.xlane.f32.xlu0 %v415
    %v527 = vpop.xlane.xlu0 %526
    %528 = vadd.xlane.f32.xlu0 %v416
    %v529 = vpop.xlane.xlu0 %528
    %530 = vadd.xlane.f32.xlu0 %v417
    %v531 = vpop.xlane.xlu0 %530
    %532 = vadd.xlane.f32.xlu0 %v418
    %v533 = vpop.xlane.xlu0 %532
    %534 = vadd.xlane.f32.xlu0 %v419
    %v535 = vpop.xlane.xlu0 %534
    %536 = vadd.xlane.f32.xlu0 %v420
    %v537 = vpop.xlane.xlu0 %536
    %538 = vadd.xlane.f32.xlu0 %v421
    %v539 = vpop.xlane.xlu0 %538
    %540 = vadd.xlane.f32.xlu0 %v422
    %v541 = vpop.xlane.xlu0 %540
    %542 = vadd.xlane.f32.xlu0 %v423
    %v543 = vpop.xlane.xlu0 %542
    %544 = vadd.xlane.f32.xlu0 %v424
    %v545 = vpop.xlane.xlu0 %544
    %546 = vadd.xlane.f32.xlu0 %v425
    %v547 = vpop.xlane.xlu0 %546
    %548 = vadd.xlane.f32.xlu0 %v426
    %v549 = vpop.xlane.xlu0 %548
    %550 = vadd.xlane.f32.xlu0 %v427
    %v551 = vpop.xlane.xlu0 %550
    %552 = vadd.xlane.f32.xlu0 %v428
    %v553 = vpop.xlane.xlu0 %552
    %554 = vadd.xlane.f32.xlu0 %v429
    %v555 = vpop.xlane.xlu0 %554
    %556 = vadd.xlane.f32.xlu0 %v430
    %v557 = vpop.xlane.xlu0 %556
    %558 = vadd.xlane.f32.xlu0 %v431
    %v559 = vpop.xlane.xlu0 %558
    %v560 = vmul.f32 %v433, %v239
    %v561 = vmul.f32 %v435, %v239
    %v562 = vmul.f32 %v437, %v239
    %v563 = vmul.f32 %v439, %v239
    %v564 = vmul.f32 %v441, %v239
    %v565 = vmul.f32 %v443, %v239
    %v566 = vmul.f32 %v445, %v239
    %v567 = vmul.f32 %v447, %v239
    %v568 = vmul.f32 %v449, %v239
    %v569 = vmul.f32 %v451, %v239
    %v570 = vmul.f32 %v453, %v239
    %v571 = vmul.f32 %v455, %v239
    %v572 = vmul.f32 %v457, %v239
    %v573 = vmul.f32 %v459, %v239
    %v574 = vmul.f32 %v461, %v239
    %v575 = vmul.f32 %v463, %v239
    %v576 = vmul.f32 %v465, %v239
    %v577 = vmul.f32 %v467, %v239
    %v578 = vmul.f32 %v469, %v239
    %v579 = vmul.f32 %v471, %v239
    %v580 = vmul.f32 %v473, %v239
    %v581 = vmul.f32 %v475, %v239
    %v582 = vmul.f32 %v477, %v239
    %v583 = vmul.f32 %v479, %v239
    %v584 = vmul.f32 %v481, %v239
    %v585 = vmul.f32 %v483, %v239
    %v586 = vmul.f32 %v485, %v239
    %v587 = vmul.f32 %v487, %v239
    %v588 = vmul.f32 %v489, %v239
    %v589 = vmul.f32 %v491, %v239
    %v590 = vmul.f32 %v493, %v239
    %v591 = vmul.f32 %v495, %v239
    %v592 = vmul.f32 %v497, %v239
    %v593 = vmul.f32 %v499, %v239
    %v594 = vmul.f32 %v501, %v239
    %v595 = vmul.f32 %v503, %v239
    %v596 = vmul.f32 %v505, %v239
    %v597 = vmul.f32 %v507, %v239
    %v598 = vmul.f32 %v509, %v239
    %v599 = vmul.f32 %v511, %v239
    %v600 = vmul.f32 %v513, %v239
    %v601 = vmul.f32 %v515, %v239
    %v602 = vmul.f32 %v517, %v239
    %v603 = vmul.f32 %v519, %v239
    %v604 = vmul.f32 %v521, %v239
    %v605 = vmul.f32 %v523, %v239
    %v606 = vmul.f32 %v525, %v239
    %v607 = vmul.f32 %v527, %v239
    %v608 = vmul.f32 %v529, %v239
    %v609 = vmul.f32 %v531, %v239
    %v610 = vmul.f32 %v533, %v239
    %v611 = vmul.f32 %v535, %v239
    %v612 = vmul.f32 %v537, %v239
    %v613 = vmul.f32 %v539, %v239
    %v614 = vmul.f32 %v541, %v239
    %v615 = vmul.f32 %v543, %v239
    %v616 = vmul.f32 %v545, %v239
    %v617 = vmul.f32 %v547, %v239
    %v618 = vmul.f32 %v549, %v239
    %v619 = vmul.f32 %v551, %v239
    %v620 = vmul.f32 %v553, %v239
    %v621 = vmul.f32 %v555, %v239
    %v622 = vmul.f32 %v557, %v239
    %v623 = vmul.f32 %v559, %v239
    %v624 = vadd.f32 %v560, 1e-05
    %v625 = vadd.f32 %v561, 1e-05
    %v626 = vadd.f32 %v562, 1e-05
    %v627 = vadd.f32 %v563, 1e-05
    %v628 = vadd.f32 %v564, 1e-05
    %v629 = vadd.f32 %v565, 1e-05
    %v630 = vadd.f32 %v566, 1e-05
    %v631 = vadd.f32 %v567, 1e-05
    %v632 = vadd.f32 %v568, 1e-05
    %v633 = vadd.f32 %v569, 1e-05
    %v634 = vadd.f32 %v570, 1e-05
    %v635 = vadd.f32 %v571, 1e-05
    %v636 = vadd.f32 %v572, 1e-05
    %v637 = vadd.f32 %v573, 1e-05
    %v638 = vadd.f32 %v574, 1e-05
    %v639 = vadd.f32 %v575, 1e-05
    %v640 = vadd.f32 %v576, 1e-05
    %v641 = vadd.f32 %v577, 1e-05
    %v642 = vadd.f32 %v578, 1e-05
    %v643 = vadd.f32 %v579, 1e-05
    %v644 = vadd.f32 %v580, 1e-05
    %v645 = vadd.f32 %v581, 1e-05
    %v646 = vadd.f32 %v582, 1e-05
    %v647 = vadd.f32 %v583, 1e-05
    %v648 = vadd.f32 %v584, 1e-05
    %v649 = vadd.f32 %v585, 1e-05
    %v650 = vadd.f32 %v586, 1e-05
    %v651 = vadd.f32 %v587, 1e-05
    %v652 = vadd.f32 %v588, 1e-05
    %v653 = vadd.f32 %v589, 1e-05
    %v654 = vadd.f32 %v590, 1e-05
    %v655 = vadd.f32 %v591, 1e-05
    %v656 = vadd.f32 %v592, 1e-05
    %v657 = vadd.f32 %v593, 1e-05
    %v658 = vadd.f32 %v594, 1e-05
    %v659 = vadd.f32 %v595, 1e-05
    %v660 = vadd.f32 %v596, 1e-05
    %v661 = vadd.f32 %v597, 1e-05
    %v662 = vadd.f32 %v598, 1e-05
    %v663 = vadd.f32 %v599, 1e-05
    %v664 = vadd.f32 %v600, 1e-05
    %v665 = vadd.f32 %v601, 1e-05
    %v666 = vadd.f32 %v602, 1e-05
    %v667 = vadd.f32 %v603, 1e-05
    %v668 = vadd.f32 %v604, 1e-05
    %v669 = vadd.f32 %v605, 1e-05
    %v670 = vadd.f32 %v606, 1e-05
    %v671 = vadd.f32 %v607, 1e-05
    %v672 = vadd.f32 %v608, 1e-05
    %v673 = vadd.f32 %v609, 1e-05
    %v674 = vadd.f32 %v610, 1e-05
    %v675 = vadd.f32 %v611, 1e-05
    %v676 = vadd.f32 %v612, 1e-05
    %v677 = vadd.f32 %v613, 1e-05
    %v678 = vadd.f32 %v614, 1e-05
    %v679 = vadd.f32 %v615, 1e-05
    %v680 = vadd.f32 %v616, 1e-05
    %v681 = vadd.f32 %v617, 1e-05
    %v682 = vadd.f32 %v618, 1e-05
    %v683 = vadd.f32 %v619, 1e-05
    %v684 = vadd.f32 %v620, 1e-05
    %v685 = vadd.f32 %v621, 1e-05
    %v686 = vadd.f32 %v622, 1e-05
    %v687 = vadd.f32 %v623, 1e-05
    %v688 = vrsqrt.pop %v624
    %v689 = vrsqrt.pop %v625
    %v690 = vrsqrt.pop %v626
    %v691 = vrsqrt.pop %v627
    %v692 = vrsqrt.pop %v628
    %v693 = vrsqrt.pop %v629
    %v694 = vrsqrt.pop %v630
    %v695 = vrsqrt.pop %v631
    %v696 = vrsqrt.pop %v632
    %v697 = vrsqrt.pop %v633
    %v698 = vrsqrt.pop %v634
    %v699 = vrsqrt.pop %v635
    %v700 = vrsqrt.pop %v636
    %v701 = vrsqrt.pop %v637
    %v702 = vrsqrt.pop %v638
    %v703 = vrsqrt.pop %v639
    %v704 = vrsqrt.pop %v640
    %v705 = vrsqrt.pop %v641
    %v706 = vrsqrt.pop %v642
    %v707 = vrsqrt.pop %v643
    %v708 = vrsqrt.pop %v644
    %v709 = vrsqrt.pop %v645
    %v710 = vrsqrt.pop %v646
    %v711 = vrsqrt.pop %v647
    %v712 = vrsqrt.pop %v648
    %v713 = vrsqrt.pop %v649
    %v714 = vrsqrt.pop %v650
    %v715 = vrsqrt.pop %v651
    %v716 = vrsqrt.pop %v652
    %v717 = vrsqrt.pop %v653
    %v718 = vrsqrt.pop %v654
    %v719 = vrsqrt.pop %v655
    %v720 = vrsqrt.pop %v656
    %v721 = vrsqrt.pop %v657
    %v722 = vrsqrt.pop %v658
    %v723 = vrsqrt.pop %v659
    %v724 = vrsqrt.pop %v660
    %v725 = vrsqrt.pop %v661
    %v726 = vrsqrt.pop %v662
    %v727 = vrsqrt.pop %v663
    %v728 = vrsqrt.pop %v664
    %v729 = vrsqrt.pop %v665
    %v730 = vrsqrt.pop %v666
    %v731 = vrsqrt.pop %v667
    %v732 = vrsqrt.pop %v668
    %v733 = vrsqrt.pop %v669
    %v734 = vrsqrt.pop %v670
    %v735 = vrsqrt.pop %v671
    %v736 = vrsqrt.pop %v672
    %v737 = vrsqrt.pop %v673
    %v738 = vrsqrt.pop %v674
    %v739 = vrsqrt.pop %v675
    %v740 = vrsqrt.pop %v676
    %v741 = vrsqrt.pop %v677
    %v742 = vrsqrt.pop %v678
    %v743 = vrsqrt.pop %v679
    %v744 = vrsqrt.pop %v680
    %v745 = vrsqrt.pop %v681
    %v746 = vrsqrt.pop %v682
    %v747 = vrsqrt.pop %v683
    %v748 = vrsqrt.pop %v684
    %v749 = vrsqrt.pop %v685
    %v750 = vrsqrt.pop %v686
    %v751 = vrsqrt.pop %v687
    %v752 = vmul.f32 %v304, %v688
    %v753 = vmul.f32 %v305, %v689
    %v754 = vmul.f32 %v306, %v690
    %v755 = vmul.f32 %v307, %v691
    %v756 = vmul.f32 %v308, %v692
    %v757 = vmul.f32 %v309, %v693
    %v758 = vmul.f32 %v310, %v694
    %v759 = vmul.f32 %v311, %v695
    %v760 = vmul.f32 %v312, %v696
    %v761 = vmul.f32 %v313, %v697
    %v762 = vmul.f32 %v314, %v698
    %v763 = vmul.f32 %v315, %v699
    %v764 = vmul.f32 %v316, %v700
    %v765 = vmul.f32 %v317, %v701
    %v766 = vmul.f32 %v318, %v702
    %v767 = vmul.f32 %v319, %v703
    %v768 = vmul.f32 %v320, %v704
    %v769 = vmul.f32 %v321, %v705
    %v770 = vmul.f32 %v322, %v706
    %v771 = vmul.f32 %v323, %v707
    %v772 = vmul.f32 %v324, %v708
    %v773 = vmul.f32 %v325, %v709
    %v774 = vmul.f32 %v326, %v710
    %v775 = vmul.f32 %v327, %v711
    %v776 = vmul.f32 %v328, %v712
    %v777 = vmul.f32 %v329, %v713
    %v778 = vmul.f32 %v330, %v714
    %v779 = vmul.f32 %v331, %v715
    %v780 = vmul.f32 %v332, %v716
    %v781 = vmul.f32 %v333, %v717
    %v782 = vmul.f32 %v334, %v718
    %v783 = vmul.f32 %v335, %v719
    %v784 = vmul.f32 %v336, %v720
    %v785 = vmul.f32 %v337, %v721
    %v786 = vmul.f32 %v338, %v722
    %v787 = vmul.f32 %v339, %v723
    %v788 = vmul.f32 %v340, %v724
    %v789 = vmul.f32 %v341, %v725
    %v790 = vmul.f32 %v342, %v726
    %v791 = vmul.f32 %v343, %v727
    %v792 = vmul.f32 %v344, %v728
    %v793 = vmul.f32 %v345, %v729
    %v794 = vmul.f32 %v346, %v730
    %v795 = vmul.f32 %v347, %v731
    %v796 = vmul.f32 %v348, %v732
    %v797 = vmul.f32 %v349, %v733
    %v798 = vmul.f32 %v350, %v734
    %v799 = vmul.f32 %v351, %v735
    %v800 = vmul.f32 %v352, %v736
    %v801 = vmul.f32 %v353, %v737
    %v802 = vmul.f32 %v354, %v738
    %v803 = vmul.f32 %v355, %v739
    %v804 = vmul.f32 %v356, %v740
    %v805 = vmul.f32 %v357, %v741
    %v806 = vmul.f32 %v358, %v742
    %v807 = vmul.f32 %v359, %v743
    %v808 = vmul.f32 %v360, %v744
    %v809 = vmul.f32 %v361, %v745
    %v810 = vmul.f32 %v362, %v746
    %v811 = vmul.f32 %v363, %v747
    %v812 = vmul.f32 %v364, %v748
    %v813 = vmul.f32 %v365, %v749
    %v814 = vmul.f32 %v366, %v750
    %v815 = vmul.f32 %v367, %v751
    %v816 = vld [vmem:[%s2] sm:$0x1]
    %v818 = vlaneseq
    %v819 = vshrl.u32 %v818, 7
    %v820 = vsub.s32 0, %v819
    %v821 = vrot.slane %v816, %v820
    %v823 = vmul.f32 %v752, %v821
    %v824 = vmul.f32 %v753, %v821
    %v825 = vmul.f32 %v754, %v821
    %v826 = vmul.f32 %v755, %v821
    %v827 = vmul.f32 %v756, %v821
    %v828 = vmul.f32 %v757, %v821
    %v829 = vmul.f32 %v758, %v821
    %v830 = vmul.f32 %v759, %v821
    %v831 = vmul.f32 %v760, %v821
    %v832 = vmul.f32 %v761, %v821
    %v833 = vmul.f32 %v762, %v821
    %v834 = vmul.f32 %v763, %v821
    %v835 = vmul.f32 %v764, %v821
    %v836 = vmul.f32 %v765, %v821
    %v837 = vmul.f32 %v766, %v821
    %v838 = vmul.f32 %v767, %v821
    %v839 = vmul.f32 %v768, %v821
    %v840 = vmul.f32 %v769, %v821
    %v841 = vmul.f32 %v770, %v821
    %v842 = vmul.f32 %v771, %v821
    %v843 = vmul.f32 %v772, %v821
    %v844 = vmul.f32 %v773, %v821
    %v845 = vmul.f32 %v774, %v821
    %v846 = vmul.f32 %v775, %v821
    %v847 = vmul.f32 %v776, %v821
    %v848 = vmul.f32 %v777, %v821
    %v849 = vmul.f32 %v778, %v821
    %v850 = vmul.f32 %v779, %v821
    %v851 = vmul.f32 %v780, %v821
    %v852 = vmul.f32 %v781, %v821
    %v853 = vmul.f32 %v782, %v821
    %v854 = vmul.f32 %v783, %v821
    %v855 = vmul.f32 %v784, %v821
    %v856 = vmul.f32 %v785, %v821
    %v857 = vmul.f32 %v786, %v821
    %v858 = vmul.f32 %v787, %v821
    %v859 = vmul.f32 %v788, %v821
    %v860 = vmul.f32 %v789, %v821
    %v861 = vmul.f32 %v790, %v821
    %v862 = vmul.f32 %v791, %v821
    %v863 = vmul.f32 %v792, %v821
    %v864 = vmul.f32 %v793, %v821
    %v865 = vmul.f32 %v794, %v821
    %v866 = vmul.f32 %v795, %v821
    %v867 = vmul.f32 %v796, %v821
    %v868 = vmul.f32 %v797, %v821
    %v869 = vmul.f32 %v798, %v821
    %v870 = vmul.f32 %v799, %v821
    %v871 = vmul.f32 %v800, %v821
    %v872 = vmul.f32 %v801, %v821
    %v873 = vmul.f32 %v802, %v821
    %v874 = vmul.f32 %v803, %v821
    %v875 = vmul.f32 %v804, %v821
    %v876 = vmul.f32 %v805, %v821
    %v877 = vmul.f32 %v806, %v821
    %v878 = vmul.f32 %v807, %v821
    %v879 = vmul.f32 %v808, %v821
    %v880 = vmul.f32 %v809, %v821
    %v881 = vmul.f32 %v810, %v821
    %v882 = vmul.f32 %v811, %v821
    %v883 = vmul.f32 %v812, %v821
    %v884 = vmul.f32 %v813, %v821
    %v885 = vmul.f32 %v814, %v821
    %v886 = vmul.f32 %v815, %v821
    %v887 = vld [vmem:[%s3] sm:$0x1]
    %v889 = vlaneseq
    %v890 = vshrl.u32 %v889, 7
    %v891 = vsub.s32 0, %v890
    %v892 = vrot.slane %v887, %v891
    %v894 = vadd.f32 %v823, %v892
    %v895 = vadd.f32 %v824, %v892
    %v896 = vadd.f32 %v825, %v892
    %v897 = vadd.f32 %v826, %v892
    %v898 = vadd.f32 %v827, %v892
    %v899 = vadd.f32 %v828, %v892
    %v900 = vadd.f32 %v829, %v892
    %v901 = vadd.f32 %v830, %v892
    %v902 = vadd.f32 %v831, %v892
    %v903 = vadd.f32 %v832, %v892
    %v904 = vadd.f32 %v833, %v892
    %v905 = vadd.f32 %v834, %v892
    %v906 = vadd.f32 %v835, %v892
    %v907 = vadd.f32 %v836, %v892
    %v908 = vadd.f32 %v837, %v892
    %v909 = vadd.f32 %v838, %v892
    %v910 = vadd.f32 %v839, %v892
    %v911 = vadd.f32 %v840, %v892
    %v912 = vadd.f32 %v841, %v892
    %v913 = vadd.f32 %v842, %v892
    %v914 = vadd.f32 %v843, %v892
    %v915 = vadd.f32 %v844, %v892
    %v916 = vadd.f32 %v845, %v892
    %v917 = vadd.f32 %v846, %v892
    %v918 = vadd.f32 %v847, %v892
    %v919 = vadd.f32 %v848, %v892
    %v920 = vadd.f32 %v849, %v892
    %v921 = vadd.f32 %v850, %v892
    %v922 = vadd.f32 %v851, %v892
    %v923 = vadd.f32 %v852, %v892
    %v924 = vadd.f32 %v853, %v892
    %v925 = vadd.f32 %v854, %v892
    %v926 = vadd.f32 %v855, %v892
    %v927 = vadd.f32 %v856, %v892
    %v928 = vadd.f32 %v857, %v892
    %v929 = vadd.f32 %v858, %v892
    %v930 = vadd.f32 %v859, %v892
    %v931 = vadd.f32 %v860, %v892
    %v932 = vadd.f32 %v861, %v892
    %v933 = vadd.f32 %v862, %v892
    %v934 = vadd.f32 %v863, %v892
    %v935 = vadd.f32 %v864, %v892
    %v936 = vadd.f32 %v865, %v892
    %v937 = vadd.f32 %v866, %v892
    %v938 = vadd.f32 %v867, %v892
    %v939 = vadd.f32 %v868, %v892
    %v940 = vadd.f32 %v869, %v892
    %v941 = vadd.f32 %v870, %v892
    %v942 = vadd.f32 %v871, %v892
    %v943 = vadd.f32 %v872, %v892
    %v944 = vadd.f32 %v873, %v892
    %v945 = vadd.f32 %v874, %v892
    %v946 = vadd.f32 %v875, %v892
    %v947 = vadd.f32 %v876, %v892
    %v948 = vadd.f32 %v877, %v892
    %v949 = vadd.f32 %v878, %v892
    %v950 = vadd.f32 %v879, %v892
    %v951 = vadd.f32 %v880, %v892
    %v952 = vadd.f32 %v881, %v892
    %v953 = vadd.f32 %v882, %v892
    %v954 = vadd.f32 %v883, %v892
    %v955 = vadd.f32 %v884, %v892
    %v956 = vadd.f32 %v885, %v892
    %v957 = vadd.f32 %v886, %v892
    %v958 = vmax.f32 %v894, 0.0
    %v959 = vmax.f32 %v895, 0.0
    %v960 = vmax.f32 %v896, 0.0
    %v961 = vmax.f32 %v897, 0.0
    %v962 = vmax.f32 %v898, 0.0
    %v963 = vmax.f32 %v899, 0.0
    %v964 = vmax.f32 %v900, 0.0
    %v965 = vmax.f32 %v901, 0.0
    %v966 = vmax.f32 %v902, 0.0
    %v967 = vmax.f32 %v903, 0.0
    %v968 = vmax.f32 %v904, 0.0
    %v969 = vmax.f32 %v905, 0.0
    %v970 = vmax.f32 %v906, 0.0
    %v971 = vmax.f32 %v907, 0.0
    %v972 = vmax.f32 %v908, 0.0
    %v973 = vmax.f32 %v909, 0.0
    %v974 = vmax.f32 %v910, 0.0
    %v975 = vmax.f32 %v911, 0.0
    %v976 = vmax.f32 %v912, 0.0
    %v977 = vmax.f32 %v913, 0.0
    %v978 = vmax.f32 %v914, 0.0
    %v979 = vmax.f32 %v915, 0.0
    %v980 = vmax.f32 %v916, 0.0
    %v981 = vmax.f32 %v917, 0.0
    %v982 = vmax.f32 %v918, 0.0
    %v983 = vmax.f32 %v919, 0.0
    %v984 = vmax.f32 %v920, 0.0
    %v985 = vmax.f32 %v921, 0.0
    %v986 = vmax.f32 %v922, 0.0
    %v987 = vmax.f32 %v923, 0.0
    %v988 = vmax.f32 %v924, 0.0
    %v989 = vmax.f32 %v925, 0.0
    %v990 = vmax.f32 %v926, 0.0
    %v991 = vmax.f32 %v927, 0.0
    %v992 = vmax.f32 %v928, 0.0
    %v993 = vmax.f32 %v929, 0.0
    %v994 = vmax.f32 %v930, 0.0
    %v995 = vmax.f32 %v931, 0.0
    %v996 = vmax.f32 %v932, 0.0
    %v997 = vmax.f32 %v933, 0.0
    %v998 = vmax.f32 %v934, 0.0
    %v999 = vmax.f32 %v935, 0.0
    %v1000 = vmax.f32 %v936, 0.0
    %v1001 = vmax.f32 %v937, 0.0
    %v1002 = vmax.f32 %v938, 0.0
    %v1003 = vmax.f32 %v939, 0.0
    %v1004 = vmax.f32 %v940, 0.0
    %v1005 = vmax.f32 %v941, 0.0
    %v1006 = vmax.f32 %v942, 0.0
    %v1007 = vmax.f32 %v943, 0.0
    %v1008 = vmax.f32 %v944, 0.0
    %v1009 = vmax.f32 %v945, 0.0
    %v1010 = vmax.f32 %v946, 0.0
    %v1011 = vmax.f32 %v947, 0.0
    %v1012 = vmax.f32 %v948, 0.0
    %v1013 = vmax.f32 %v949, 0.0
    %v1014 = vmax.f32 %v950, 0.0
    %v1015 = vmax.f32 %v951, 0.0
    %v1016 = vmax.f32 %v952, 0.0
    %v1017 = vmax.f32 %v953, 0.0
    %v1018 = vmax.f32 %v954, 0.0
    %v1019 = vmax.f32 %v955, 0.0
    %v1020 = vmax.f32 %v956, 0.0
    %v1021 = vmax.f32 %v957, 0.0
    %v1022 = vpack.c.bf16 %v959, %v958
    %v1023 = vpack.c.bf16 %v961, %v960
    %v1024 = vpack.c.bf16 %v963, %v962
    %v1025 = vpack.c.bf16 %v965, %v964
    %v1026 = vpack.c.bf16 %v967, %v966
    %v1027 = vpack.c.bf16 %v969, %v968
    %v1028 = vpack.c.bf16 %v971, %v970
    %v1029 = vpack.c.bf16 %v973, %v972
    %v1030 = vpack.c.bf16 %v975, %v974
    %v1031 = vpack.c.bf16 %v977, %v976
    %v1032 = vpack.c.bf16 %v979, %v978
    %v1033 = vpack.c.bf16 %v981, %v980
    %v1034 = vpack.c.bf16 %v983, %v982
    %v1035 = vpack.c.bf16 %v985, %v984
    %v1036 = vpack.c.bf16 %v987, %v986
    %v1037 = vpack.c.bf16 %v989, %v988
    %v1038 = vpack.c.bf16 %v991, %v990
    %v1039 = vpack.c.bf16 %v993, %v992
    %v1040 = vpack.c.bf16 %v995, %v994
    %v1041 = vpack.c.bf16 %v997, %v996
    %v1042 = vpack.c.bf16 %v999, %v998
    %v1043 = vpack.c.bf16 %v1001, %v1000
    %v1044 = vpack.c.bf16 %v1003, %v1002
    %v1045 = vpack.c.bf16 %v1005, %v1004
    %v1046 = vpack.c.bf16 %v1007, %v1006
    %v1047 = vpack.c.bf16 %v1009, %v1008
    %v1048 = vpack.c.bf16 %v1011, %v1010
    %v1049 = vpack.c.bf16 %v1013, %v1012
    %v1050 = vpack.c.bf16 %v1015, %v1014
    %v1051 = vpack.c.bf16 %v1017, %v1016
    %v1052 = vpack.c.bf16 %v1019, %v1018
    %v1053 = vpack.c.bf16 %v1021, %v1020
    %v1054 = vld [vmem:[#allocation5] sm:$0xf]
    %v1055 = vld [vmem:[#allocation5 + $0x4] sm:$0xf]
    %v1056 = vld [vmem:[#allocation5 + $0x8] sm:$0xf]
    %v1057 = vld [vmem:[#allocation5 + $0xc] sm:$0xf]
    %v1058 = vld [vmem:[#allocation5 + $0x10] sm:$0xf]
    %v1059 = vld [vmem:[#allocation5 + $0x14] sm:$0xf]
    %v1060 = vld [vmem:[#allocation5 + $0x18] sm:$0xf]
    %v1061 = vld [vmem:[#allocation5 + $0x1c] sm:$0xf]
    %v1062 = vld [vmem:[#allocation5 + $0x20] sm:$0xf]
    %v1063 = vld [vmem:[#allocation5 + $0x24] sm:$0xf]
    %v1064 = vld [vmem:[#allocation5 + $0x28] sm:$0xf]
    %v1065 = vld [vmem:[#allocation5 + $0x2c] sm:$0xf]
    %v1066 = vld [vmem:[#allocation5 + $0x30] sm:$0xf]
    %v1067 = vld [vmem:[#allocation5 + $0x34] sm:$0xf]
    %v1068 = vld [vmem:[#allocation5 + $0x38] sm:$0xf]
    %v1069 = vld [vmem:[#allocation5 + $0x3c] sm:$0xf]
    %v1086 = vunpack.c.l.b16 %v1054
    %v1087 = vunpack.c.l.b16 %v1055
    %v1088 = vunpack.c.l.b16 %v1056
    %v1089 = vunpack.c.l.b16 %v1057
    %v1090 = vunpack.c.l.b16 %v1058
    %v1091 = vunpack.c.l.b16 %v1059
    %v1092 = vunpack.c.l.b16 %v1060
    %v1093 = vunpack.c.l.b16 %v1061
    %v1094 = vunpack.c.l.b16 %v1062
    %v1095 = vunpack.c.l.b16 %v1063
    %v1096 = vunpack.c.l.b16 %v1064
    %v1097 = vunpack.c.l.b16 %v1065
    %v1098 = vunpack.c.l.b16 %v1066
    %v1099 = vunpack.c.l.b16 %v1067
    %v1100 = vunpack.c.l.b16 %v1068
    %v1101 = vunpack.c.l.b16 %v1069
    %v1102 = vpack.c.b16 %v1087, %v1086
    %v1103 = vpack.c.b16 %v1089, %v1088
    %v1104 = vpack.c.b16 %v1091, %v1090
    %v1105 = vpack.c.b16 %v1093, %v1092
    %v1106 = vpack.c.b16 %v1095, %v1094
    %v1107 = vpack.c.b16 %v1097, %v1096
    %v1108 = vpack.c.b16 %v1099, %v1098
    %v1109 = vpack.c.b16 %v1101, %v1100
    %1118 = vmatprep.subr.bf16.mxu0 0
    %1119 = vmatpush1.bf16.msra.mxu0 %v1102
    %1120 = vmatprep.subr.bf16.mxu0 0
    %1121 = vmatpush1.bf16.msra.mxu0 %v1103
    %1122 = vmatprep.subr.bf16.mxu0 0
    %1123 = vmatpush1.bf16.msra.mxu0 %v1104
    %1124 = vmatprep.subr.bf16.mxu0 0
    %1125 = vmatpush1.bf16.msra.mxu0 %v1105
    %1126 = vmatprep.subr.bf16.mxu0 0
    %1127 = vmatpush1.bf16.msra.mxu0 %v1106
    %1128 = vmatprep.subr.bf16.mxu0 0
    %1129 = vmatpush1.bf16.msra.mxu0 %v1107
    %1130 = vmatprep.subr.bf16.mxu0 0
    %1131 = vmatpush1.bf16.msra.mxu0 %v1108
    %1132 = vmatprep.subr.bf16.mxu0 0
    %1133 = vmatpush1.bf16.msra.mxu0 %v1109
    %1134 = vmatprep.subr.bf16.mxu0 0
    %1135 = vmatpush1.bf16.msra.mxu0 0
    %1136 = vmatprep.subr.bf16.mxu0 0
    %1137 = vmatpush1.bf16.msra.mxu0 0
    %1138 = vmatprep.subr.bf16.mxu0 0
    %1139 = vmatpush1.bf16.msra.mxu0 0
    %1140 = vmatprep.subr.bf16.mxu0 0
    %1141 = vmatpush1.bf16.msra.mxu0 0
    %1142 = vmatprep.subr.bf16.mxu0 0
    %1143 = vmatpush1.bf16.msra.mxu0 0
    %1144 = vmatprep.subr.bf16.mxu0 0
    %1145 = vmatpush1.bf16.msra.mxu0 0
    %1146 = vmatprep.subr.bf16.mxu0 0
    %1147 = vmatpush1.bf16.msra.mxu0 0
    %1148 = vmatprep.subr.bf16.mxu0 0
    %1149 = vmatpush1.bf16.msra.mxu0 0
    %1150 = vmatprep.mubr.bf16.mxu0 0
    %1151 = vmatmul.mubr.bf16.gmra.mrb[0].mxu0 %v1022
    %v1152 = vpop.f32.mrb[0].mxu0
    %v1153 = vadd.f32 0.0, %v1152
    %v1154 = vpop.f32.mrb[0].mxu0
    %v1155 = vpop.f32.mrb[0].mxu0
    %v1156 = vadd.f32 0.0, %v1155
    %v1157 = vpop.f32.mrb[0].mxu0
    %1158 = vmatprep.mubr.bf16.mxu0 0
    %1159 = vmatmul.mubr.bf16.gmra.mrb[0].mxu0 %v1023
    %v1160 = vpop.f32.mrb[0].mxu0
    %v1161 = vadd.f32 0.0, %v1160
    %v1162 = vpop.f32.mrb[0].mxu0
    %v1163 = vpop.f32.mrb[0].mxu0
    %v1164 = vadd.f32 0.0, %v1163
    %v1165 = vpop.f32.mrb[0].mxu0
    %1166 = vmatprep.mubr.bf16.mxu0 0
    %1167 = vmatmul.mubr.bf16.gmra.mrb[0].mxu0 %v1024
    %v1168 = vpop.f32.mrb[0].mxu0
    %v1169 = vadd.f32 0.0, %v1168
    %v1170 = vpop.f32.mrb[0].mxu0
    %v1171 = vpop.f32.mrb[0].mxu0
    %v1172 = vadd.f32 0.0, %v1171
    %v1173 = vpop.f32.mrb[0].mxu0
    %1174 = vmatprep.mubr.bf16.mxu0 0
    %1175 = vmatmul.mubr.bf16.gmra.mrb[0].mxu0 %v1025
    %v1176 = vpop.f32.mrb[0].mxu0
    %v1177 = vadd.f32 0.0, %v1176
    %v1178 = vpop.f32.mrb[0].mxu0
    %v1179 = vpop.f32.mrb[0].mxu0
    %v1180 = vadd.f32 0.0, %v1179
    %v1181 = vpop.f32.mrb[0].mxu0
    %1182 = vmatprep.mubr.bf16.mxu0 0
    %1183 = vmatmul.mubr.bf16.gmra.mrb[0].mxu0 %v1026
    %v1184 = vpop.f32.mrb[0].mxu0
    %v1185 = vadd.f32 0.0, %v1184
    %v1186 = vpop.f32.mrb[0].mxu0
    %v1187 = vpop.f32.mrb[0].mxu0
    %v1188 = vadd.f32 0.0, %v1187
    %v1189 = vpop.f32.mrb[0].mxu0
    %1190 = vmatprep.mubr.bf16.mxu0 0
    %1191 = vmatmul.mubr.bf16.gmra.mrb[0].mxu0 %v1027
    %v1192 = vpop.f32.mrb[0].mxu0
    %v1193 = vadd.f32 0.0, %v1192
    %v1194 = vpop.f32.mrb[0].mxu0
    %v1195 = vpop.f32.mrb[0].mxu0
    %v1196 = vadd.f32 0.0, %v1195
    %v1197 = vpop.f32.mrb[0].mxu0
    %1198 = vmatprep.mubr.bf16.mxu0 0
    %1199 = vmatmul.mubr.bf16.gmra.mrb[0].mxu0 %v1028
    %v1200 = vpop.f32.mrb[0].mxu0
    %v1201 = vadd.f32 0.0, %v1200
    %v1202 = vpop.f32.mrb[0].mxu0
    %v1203 = vpop.f32.mrb[0].mxu0
    %v1204 = vadd.f32 0.0, %v1203
    %v1205 = vpop.f32.mrb[0].mxu0
    %1206 = vmatprep.mubr.bf16.mxu0 0
    %1207 = vmatmul.mubr.bf16.gmra.mrb[0].mxu0 %v1029
    %v1208 = vpop.f32.mrb[0].mxu0
    %v1209 = vadd.f32 0.0, %v1208
    %v1210 = vpop.f32.mrb[0].mxu0
    %v1211 = vpop.f32.mrb[0].mxu0
    %v1212 = vadd.f32 0.0, %v1211
    %v1213 = vpop.f32.mrb[0].mxu0
    %1214 = vmatprep.mubr.bf16.mxu0 0
    %1215 = vmatmul.mubr.bf16.gmra.mrb[0].mxu0 %v1030
    %v1216 = vpop.f32.mrb[0].mxu0
    %v1217 = vadd.f32 0.0, %v1216
    %v1218 = vpop.f32.mrb[0].mxu0
    %v1219 = vpop.f32.mrb[0].mxu0
    %v1220 = vadd.f32 0.0, %v1219
    %v1221 = vpop.f32.mrb[0].mxu0
    %1222 = vmatprep.mubr.bf16.mxu0 0
    %1223 = vmatmul.mubr.bf16.gmra.mrb[0].mxu0 %v1031
    %v1224 = vpop.f32.mrb[0].mxu0
    %v1225 = vadd.f32 0.0, %v1224
    %v1226 = vpop.f32.mrb[0].mxu0
    %v1227 = vpop.f32.mrb[0].mxu0
    %v1228 = vadd.f32 0.0, %v1227
    %v1229 = vpop.f32.mrb[0].mxu0
    %1230 = vmatprep.mubr.bf16.mxu0 0
    %1231 = vmatmul.mubr.bf16.gmra.mrb[0].mxu0 %v1032
    %v1232 = vpop.f32.mrb[0].mxu0
    %v1233 = vadd.f32 0.0, %v1232
    %v1234 = vpop.f32.mrb[0].mxu0
    %v1235 = vpop.f32.mrb[0].mxu0
    %v1236 = vadd.f32 0.0, %v1235
    %v1237 = vpop.f32.mrb[0].mxu0
    %1238 = vmatprep.mubr.bf16.mxu0 0
    %1239 = vmatmul.mubr.bf16.gmra.mrb[0].mxu0 %v1033
    %v1240 = vpop.f32.mrb[0].mxu0
    %v1241 = vadd.f32 0.0, %v1240
    %v1242 = vpop.f32.mrb[0].mxu0
    %v1243 = vpop.f32.mrb[0].mxu0
    %v1244 = vadd.f32 0.0, %v1243
    %v1245 = vpop.f32.mrb[0].mxu0
    %1246 = vmatprep.mubr.bf16.mxu0 0
    %1247 = vmatmul.mubr.bf16.gmra.mrb[0].mxu0 %v1034
    %v1248 = vpop.f32.mrb[0].mxu0
    %v1249 = vadd.f32 0.0, %v1248
    %v1250 = vpop.f32.mrb[0].mxu0
    %v1251 = vpop.f32.mrb[0].mxu0
    %v1252 = vadd.f32 0.0, %v1251
    %v1253 = vpop.f32.mrb[0].mxu0
    %1254 = vmatprep.mubr.bf16.mxu0 0
    %1255 = vmatmul.mubr.bf16.gmra.mrb[0].mxu0 %v1035
    %v1256 = vpop.f32.mrb[0].mxu0
    %v1257 = vadd.f32 0.0, %v1256
    %v1258 = vpop.f32.mrb[0].mxu0
    %v1259 = vpop.f32.mrb[0].mxu0
    %v1260 = vadd.f32 0.0, %v1259
    %v1261 = vpop.f32.mrb[0].mxu0
    %1262 = vmatprep.mubr.bf16.mxu0 0
    %1263 = vmatmul.mubr.bf16.gmra.mrb[0].mxu0 %v1036
    %v1264 = vpop.f32.mrb[0].mxu0
    %v1265 = vadd.f32 0.0, %v1264
    %v1266 = vpop.f32.mrb[0].mxu0
    %v1267 = vpop.f32.mrb[0].mxu0
    %v1268 = vadd.f32 0.0, %v1267
    %v1269 = vpop.f32.mrb[0].mxu0
    %1270 = vmatprep.mubr.bf16.mxu0 0
    %1271 = vmatmul.mubr.bf16.gmra.mrb[0].mxu0 %v1037
    %v1272 = vpop.f32.mrb[0].mxu0
    %v1273 = vadd.f32 0.0, %v1272
    %v1274 = vpop.f32.mrb[0].mxu0
    %v1275 = vpop.f32.mrb[0].mxu0
    %v1276 = vadd.f32 0.0, %v1275
    %v1277 = vpop.f32.mrb[0].mxu0
    %1278 = vmatprep.mubr.bf16.mxu0 0
    %1279 = vmatmul.mubr.bf16.gmra.mrb[0].mxu0 %v1038
    %v1280 = vpop.f32.mrb[0].mxu0
    %v1281 = vadd.f32 0.0, %v1280
    %v1282 = vpop.f32.mrb[0].mxu0
    %v1283 = vpop.f32.mrb[0].mxu0
    %v1284 = vadd.f32 0.0, %v1283
    %v1285 = vpop.f32.mrb[0].mxu0
    %1286 = vmatprep.mubr.bf16.mxu0 0
    %1287 = vmatmul.mubr.bf16.gmra.mrb[0].mxu0 %v1039
    %v1288 = vpop.f32.mrb[0].mxu0
    %v1289 = vadd.f32 0.0, %v1288
    %v1290 = vpop.f32.mrb[0].mxu0
    %v1291 = vpop.f32.mrb[0].mxu0
    %v1292 = vadd.f32 0.0, %v1291
    %v1293 = vpop.f32.mrb[0].mxu0
    %1294 = vmatprep.mubr.bf16.mxu0 0
    %1295 = vmatmul.mubr.bf16.gmra.mrb[0].mxu0 %v1040
    %v1296 = vpop.f32.mrb[0].mxu0
    %v1297 = vadd.f32 0.0, %v1296
    %v1298 = vpop.f32.mrb[0].mxu0
    %v1299 = vpop.f32.mrb[0].mxu0
    %v1300 = vadd.f32 0.0, %v1299
    %v1301 = vpop.f32.mrb[0].mxu0
    %1302 = vmatprep.mubr.bf16.mxu0 0
    %1303 = vmatmul.mubr.bf16.gmra.mrb[0].mxu0 %v1041
    %v1304 = vpop.f32.mrb[0].mxu0
    %v1305 = vadd.f32 0.0, %v1304
    %v1306 = vpop.f32.mrb[0].mxu0
    %v1307 = vpop.f32.mrb[0].mxu0
    %v1308 = vadd.f32 0.0, %v1307
    %v1309 = vpop.f32.mrb[0].mxu0
    %1310 = vmatprep.mubr.bf16.mxu0 0
    %1311 = vmatmul.mubr.bf16.gmra.mrb[0].mxu0 %v1042
    %v1312 = vpop.f32.mrb[0].mxu0
    %v1313 = vadd.f32 0.0, %v1312
    %v1314 = vpop.f32.mrb[0].mxu0
    %v1315 = vpop.f32.mrb[0].mxu0
    %v1316 = vadd.f32 0.0, %v1315
    %v1317 = vpop.f32.mrb[0].mxu0
    %1318 = vmatprep.mubr.bf16.mxu0 0
    %1319 = vmatmul.mubr.bf16.gmra.mrb[0].mxu0 %v1043
    %v1320 = vpop.f32.mrb[0].mxu0
    %v1321 = vadd.f32 0.0, %v1320
    %v1322 = vpop.f32.mrb[0].mxu0
    %v1323 = vpop.f32.mrb[0].mxu0
    %v1324 = vadd.f32 0.0, %v1323
    %v1325 = vpop.f32.mrb[0].mxu0
    %1326 = vmatprep.mubr.bf16.mxu0 0
    %1327 = vmatmul.mubr.bf16.gmra.mrb[0].mxu0 %v1044
    %v1328 = vpop.f32.mrb[0].mxu0
    %v1329 = vadd.f32 0.0, %v1328
    %v1330 = vpop.f32.mrb[0].mxu0
    %v1331 = vpop.f32.mrb[0].mxu0
    %v1332 = vadd.f32 0.0, %v1331
    %v1333 = vpop.f32.mrb[0].mxu0
    %1334 = vmatprep.mubr.bf16.mxu0 0
    %1335 = vmatmul.mubr.bf16.gmra.mrb[0].mxu0 %v1045
    %v1336 = vpop.f32.mrb[0].mxu0
    %v1337 = vadd.f32 0.0, %v1336
    %v1338 = vpop.f32.mrb[0].mxu0
    %v1339 = vpop.f32.mrb[0].mxu0
    %v1340 = vadd.f32 0.0, %v1339
    %v1341 = vpop.f32.mrb[0].mxu0
    %1342 = vmatprep.mubr.bf16.mxu0 0
    %1343 = vmatmul.mubr.bf16.gmra.mrb[0].mxu0 %v1046
    %v1344 = vpop.f32.mrb[0].mxu0
    %v1345 = vadd.f32 0.0, %v1344
    %v1346 = vpop.f32.mrb[0].mxu0
    %v1347 = vpop.f32.mrb[0].mxu0
    %v1348 = vadd.f32 0.0, %v1347
    %v1349 = vpop.f32.mrb[0].mxu0
    %1350 = vmatprep.mubr.bf16.mxu0 0
    %1351 = vmatmul.mubr.bf16.gmra.mrb[0].mxu0 %v1047
    %v1352 = vpop.f32.mrb[0].mxu0
    %v1353 = vadd.f32 0.0, %v1352
    %v1354 = vpop.f32.mrb[0].mxu0
    %v1355 = vpop.f32.mrb[0].mxu0
    %v1356 = vadd.f32 0.0, %v1355
    %v1357 = vpop.f32.mrb[0].mxu0
    %1358 = vmatprep.mubr.bf16.mxu0 0
    %1359 = vmatmul.mubr.bf16.gmra.mrb[0].mxu0 %v1048
    %v1360 = vpop.f32.mrb[0].mxu0
    %v1361 = vadd.f32 0.0, %v1360
    %v1362 = vpop.f32.mrb[0].mxu0
    %v1363 = vpop.f32.mrb[0].mxu0
    %v1364 = vadd.f32 0.0, %v1363
    %v1365 = vpop.f32.mrb[0].mxu0
    %1366 = vmatprep.mubr.bf16.mxu0 0
    %1367 = vmatmul.mubr.bf16.gmra.mrb[0].mxu0 %v1049
    %v1368 = vpop.f32.mrb[0].mxu0
    %v1369 = vadd.f32 0.0, %v1368
    %v1370 = vpop.f32.mrb[0].mxu0
    %v1371 = vpop.f32.mrb[0].mxu0
    %v1372 = vadd.f32 0.0, %v1371
    %v1373 = vpop.f32.mrb[0].mxu0
    %1374 = vmatprep.mubr.bf16.mxu0 0
    %1375 = vmatmul.mubr.bf16.gmra.mrb[0].mxu0 %v1050
    %v1376 = vpop.f32.mrb[0].mxu0
    %v1377 = vadd.f32 0.0, %v1376
    %v1378 = vpop.f32.mrb[0].mxu0
    %v1379 = vpop.f32.mrb[0].mxu0
    %v1380 = vadd.f32 0.0, %v1379
    %v1381 = vpop.f32.mrb[0].mxu0
    %1382 = vmatprep.mubr.bf16.mxu0 0
    %1383 = vmatmul.mubr.bf16.gmra.mrb[0].mxu0 %v1051
    %v1384 = vpop.f32.mrb[0].mxu0
    %v1385 = vadd.f32 0.0, %v1384
    %v1386 = vpop.f32.mrb[0].mxu0
    %v1387 = vpop.f32.mrb[0].mxu0
    %v1388 = vadd.f32 0.0, %v1387
    %v1389 = vpop.f32.mrb[0].mxu0
    %1390 = vmatprep.mubr.bf16.mxu0 0
    %1391 = vmatmul.mubr.bf16.gmra.mrb[0].mxu0 %v1052
    %v1392 = vpop.f32.mrb[0].mxu0
    %v1393 = vadd.f32 0.0, %v1392
    %v1394 = vpop.f32.mrb[0].mxu0
    %v1395 = vpop.f32.mrb[0].mxu0
    %v1396 = vadd.f32 0.0, %v1395
    %v1397 = vpop.f32.mrb[0].mxu0
    %1398 = vmatprep.mubr.bf16.mxu0 0
    %1399 = vmatmul.mubr.bf16.gmra.mrb[0].mxu0 %v1053
    %v1400 = vpop.f32.mrb[0].mxu0
    %v1401 = vadd.f32 0.0, %v1400
    %v1402 = vpop.f32.mrb[0].mxu0
    %v1403 = vpop.f32.mrb[0].mxu0
    %v1404 = vadd.f32 0.0, %v1403
    %v1405 = vpop.f32.mrb[0].mxu0
    %1406 = vdwg.mxu0
    %v1407 = vpack.c.bf16 %v1156, %v1153
    %v1408 = vpack.c.bf16 %v1164, %v1161
    %v1409 = vpack.c.bf16 %v1172, %v1169
    %v1410 = vpack.c.bf16 %v1180, %v1177
    %v1411 = vpack.c.bf16 %v1188, %v1185
    %v1412 = vpack.c.bf16 %v1196, %v1193
    %v1413 = vpack.c.bf16 %v1204, %v1201
    %v1414 = vpack.c.bf16 %v1212, %v1209
    %v1415 = vpack.c.bf16 %v1220, %v1217
    %v1416 = vpack.c.bf16 %v1228, %v1225
    %v1417 = vpack.c.bf16 %v1236, %v1233
    %v1418 = vpack.c.bf16 %v1244, %v1241
    %v1419 = vpack.c.bf16 %v1252, %v1249
    %v1420 = vpack.c.bf16 %v1260, %v1257
    %v1421 = vpack.c.bf16 %v1268, %v1265
    %v1422 = vpack.c.bf16 %v1276, %v1273
    %v1423 = vpack.c.bf16 %v1284, %v1281
    %v1424 = vpack.c.bf16 %v1292, %v1289
    %v1425 = vpack.c.bf16 %v1300, %v1297
    %v1426 = vpack.c.bf16 %v1308, %v1305
    %v1427 = vpack.c.bf16 %v1316, %v1313
    %v1428 = vpack.c.bf16 %v1324, %v1321
    %v1429 = vpack.c.bf16 %v1332, %v1329
    %v1430 = vpack.c.bf16 %v1340, %v1337
    %v1431 = vpack.c.bf16 %v1348, %v1345
    %v1432 = vpack.c.bf16 %v1356, %v1353
    %v1433 = vpack.c.bf16 %v1364, %v1361
    %v1434 = vpack.c.bf16 %v1372, %v1369
    %v1435 = vpack.c.bf16 %v1380, %v1377
    %v1436 = vpack.c.bf16 %v1388, %v1385
    %v1437 = vpack.c.bf16 %v1396, %v1393
    %v1438 = vpack.c.bf16 %v1404, %v1401
    %v1471 = vunpack.c.l.b16 %v1407
    %v1472 = vunpack.c.h.b16 %v1407
    %v1473 = vunpack.c.l.b16 %v1408
    %v1474 = vunpack.c.h.b16 %v1408
    %v1475 = vunpack.c.l.b16 %v1409
    %v1476 = vunpack.c.h.b16 %v1409
    %v1477 = vunpack.c.l.b16 %v1410
    %v1478 = vunpack.c.h.b16 %v1410
    %v1479 = vunpack.c.l.b16 %v1411
    %v1480 = vunpack.c.h.b16 %v1411
    %v1481 = vunpack.c.l.b16 %v1412
    %v1482 = vunpack.c.h.b16 %v1412
    %v1483 = vunpack.c.l.b16 %v1413
    %v1484 = vunpack.c.h.b16 %v1413
    %v1485 = vunpack.c.l.b16 %v1414
    %v1486 = vunpack.c.h.b16 %v1414
    %v1487 = vunpack.c.l.b16 %v1415
    %v1488 = vunpack.c.h.b16 %v1415
    %v1489 = vunpack.c.l.b16 %v1416
    %v1490 = vunpack.c.h.b16 %v1416
    %v1491 = vunpack.c.l.b16 %v1417
    %v1492 = vunpack.c.h.b16 %v1417
    %v1493 = vunpack.c.l.b16 %v1418
    %v1494 = vunpack.c.h.b16 %v1418
    %v1495 = vunpack.c.l.b16 %v1419
    %v1496 = vunpack.c.h.b16 %v1419
    %v1497 = vunpack.c.l.b16 %v1420
    %v1498 = vunpack.c.h.b16 %v1420
    %v1499 = vunpack.c.l.b16 %v1421
    %v1500 = vunpack.c.h.b16 %v1421
    %v1501 = vunpack.c.l.b16 %v1422
    %v1502 = vunpack.c.h.b16 %v1422
    %v1503 = vunpack.c.l.b16 %v1423
    %v1504 = vunpack.c.h.b16 %v1423
    %v1505 = vunpack.c.l.b16 %v1424
    %v1506 = vunpack.c.h.b16 %v1424
    %v1507 = vunpack.c.l.b16 %v1425
    %v1508 = vunpack.c.h.b16 %v1425
    %v1509 = vunpack.c.l.b16 %v1426
    %v1510 = vunpack.c.h.b16 %v1426
    %v1511 = vunpack.c.l.b16 %v1427
    %v1512 = vunpack.c.h.b16 %v1427
    %v1513 = vunpack.c.l.b16 %v1428
    %v1514 = vunpack.c.h.b16 %v1428
    %v1515 = vunpack.c.l.b16 %v1429
    %v1516 = vunpack.c.h.b16 %v1429
    %v1517 = vunpack.c.l.b16 %v1430
    %v1518 = vunpack.c.h.b16 %v1430
    %v1519 = vunpack.c.l.b16 %v1431
    %v1520 = vunpack.c.h.b16 %v1431
    %v1521 = vunpack.c.l.b16 %v1432
    %v1522 = vunpack.c.h.b16 %v1432
    %v1523 = vunpack.c.l.b16 %v1433
    %v1524 = vunpack.c.h.b16 %v1433
    %v1525 = vunpack.c.l.b16 %v1434
    %v1526 = vunpack.c.h.b16 %v1434
    %v1527 = vunpack.c.l.b16 %v1435
    %v1528 = vunpack.c.h.b16 %v1435
    %v1529 = vunpack.c.l.b16 %v1436
    %v1530 = vunpack.c.h.b16 %v1436
    %v1531 = vunpack.c.l.b16 %v1437
    %v1532 = vunpack.c.h.b16 %v1437
    %v1533 = vunpack.c.l.b16 %v1438
    %v1534 = vunpack.c.h.b16 %v1438
    %v1535 = vpack.c.b16 %v1471, %v1471
    %v1536 = vpack.c.b16 %v1472, %v1472
    %v1537 = vpack.c.b16 %v1473, %v1473
    %v1538 = vpack.c.b16 %v1474, %v1474
    %v1539 = vpack.c.b16 %v1475, %v1475
    %v1540 = vpack.c.b16 %v1476, %v1476
    %v1541 = vpack.c.b16 %v1477, %v1477
    %v1542 = vpack.c.b16 %v1478, %v1478
    %v1543 = vpack.c.b16 %v1479, %v1479
    %v1544 = vpack.c.b16 %v1480, %v1480
    %v1545 = vpack.c.b16 %v1481, %v1481
    %v1546 = vpack.c.b16 %v1482, %v1482
    %v1547 = vpack.c.b16 %v1483, %v1483
    %v1548 = vpack.c.b16 %v1484, %v1484
    %v1549 = vpack.c.b16 %v1485, %v1485
    %v1550 = vpack.c.b16 %v1486, %v1486
    %v1551 = vpack.c.b16 %v1487, %v1487
    %v1552 = vpack.c.b16 %v1488, %v1488
    %v1553 = vpack.c.b16 %v1489, %v1489
    %v1554 = vpack.c.b16 %v1490, %v1490
    %v1555 = vpack.c.b16 %v1491, %v1491
    %v1556 = vpack.c.b16 %v1492, %v1492
    %v1557 = vpack.c.b16 %v1493, %v1493
    %v1558 = vpack.c.b16 %v1494, %v1494
    %v1559 = vpack.c.b16 %v1495, %v1495
    %v1560 = vpack.c.b16 %v1496, %v1496
    %v1561 = vpack.c.b16 %v1497, %v1497
    %v1562 = vpack.c.b16 %v1498, %v1498
    %v1563 = vpack.c.b16 %v1499, %v1499
    %v1564 = vpack.c.b16 %v1500, %v1500
    %v1565 = vpack.c.b16 %v1501, %v1501
    %v1566 = vpack.c.b16 %v1502, %v1502
    %v1567 = vpack.c.b16 %v1503, %v1503
    %v1568 = vpack.c.b16 %v1504, %v1504
    %v1569 = vpack.c.b16 %v1505, %v1505
    %v1570 = vpack.c.b16 %v1506, %v1506
    %v1571 = vpack.c.b16 %v1507, %v1507
    %v1572 = vpack.c.b16 %v1508, %v1508
    %v1573 = vpack.c.b16 %v1509, %v1509
    %v1574 = vpack.c.b16 %v1510, %v1510
    %v1575 = vpack.c.b16 %v1511, %v1511
    %v1576 = vpack.c.b16 %v1512, %v1512
    %v1577 = vpack.c.b16 %v1513, %v1513
    %v1578 = vpack.c.b16 %v1514, %v1514
    %v1579 = vpack.c.b16 %v1515, %v1515
    %v1580 = vpack.c.b16 %v1516, %v1516
    %v1581 = vpack.c.b16 %v1517, %v1517
    %v1582 = vpack.c.b16 %v1518, %v1518
    %v1583 = vpack.c.b16 %v1519, %v1519
    %v1584 = vpack.c.b16 %v1520, %v1520
    %v1585 = vpack.c.b16 %v1521, %v1521
    %v1586 = vpack.c.b16 %v1522, %v1522
    %v1587 = vpack.c.b16 %v1523, %v1523
    %v1588 = vpack.c.b16 %v1524, %v1524
    %v1589 = vpack.c.b16 %v1525, %v1525
    %v1590 = vpack.c.b16 %v1526, %v1526
    %v1591 = vpack.c.b16 %v1527, %v1527
    %v1592 = vpack.c.b16 %v1528, %v1528
    %v1593 = vpack.c.b16 %v1529, %v1529
    %v1594 = vpack.c.b16 %v1530, %v1530
    %v1595 = vpack.c.b16 %v1531, %v1531
    %v1596 = vpack.c.b16 %v1532, %v1532
    %v1597 = vpack.c.b16 %v1533, %v1533
    %v1598 = vpack.c.b16 %v1534, %v1534
    %1663 = vst [vmem:[#allocation7] sm:$0xf] %v1535
    %1664 = vst [vmem:[#allocation7 + $0x4] sm:$0xf] %v1536
    %1665 = vst [vmem:[#allocation7 + $0x8] sm:$0xf] %v1537
    %1666 = vst [vmem:[#allocation7 + $0xc] sm:$0xf] %v1538
    %1667 = vst [vmem:[#allocation7 + $0x10] sm:$0xf] %v1539
    %1668 = vst [vmem:[#allocation7 + $0x14] sm:$0xf] %v1540
    %1669 = vst [vmem:[#allocation7 + $0x18] sm:$0xf] %v1541
    %1670 = vst [vmem:[#allocation7 + $0x1c] sm:$0xf] %v1542
    %1671 = vst [vmem:[#allocation7 + $0x20] sm:$0xf] %v1543
    %1672 = vst [vmem:[#allocation7 + $0x24] sm:$0xf] %v1544
    %1673 = vst [vmem:[#allocation7 + $0x28] sm:$0xf] %v1545
    %1674 = vst [vmem:[#allocation7 + $0x2c] sm:$0xf] %v1546
    %1675 = vst [vmem:[#allocation7 + $0x30] sm:$0xf] %v1547
    %1676 = vst [vmem:[#allocation7 + $0x34] sm:$0xf] %v1548
    %1677 = vst [vmem:[#allocation7 + $0x38] sm:$0xf] %v1549
    %1678 = vst [vmem:[#allocation7 + $0x3c] sm:$0xf] %v1550
    %1679 = vst [vmem:[#allocation7 + $0x40] sm:$0xf] %v1551
    %1680 = vst [vmem:[#allocation7 + $0x44] sm:$0xf] %v1552
    %1681 = vst [vmem:[#allocation7 + $0x48] sm:$0xf] %v1553
    %1682 = vst [vmem:[#allocation7 + $0x4c] sm:$0xf] %v1554
    %1683 = vst [vmem:[#allocation7 + $0x50] sm:$0xf] %v1555
    %1684 = vst [vmem:[#allocation7 + $0x54] sm:$0xf] %v1556
    %1685 = vst [vmem:[#allocation7 + $0x58] sm:$0xf] %v1557
    %1686 = vst [vmem:[#allocation7 + $0x5c] sm:$0xf] %v1558
    %1687 = vst [vmem:[#allocation7 + $0x60] sm:$0xf] %v1559
    %1688 = vst [vmem:[#allocation7 + $0x64] sm:$0xf] %v1560
    %1689 = vst [vmem:[#allocation7 + $0x68] sm:$0xf] %v1561
    %1690 = vst [vmem:[#allocation7 + $0x6c] sm:$0xf] %v1562
    %1691 = vst [vmem:[#allocation7 + $0x70] sm:$0xf] %v1563
    %1692 = vst [vmem:[#allocation7 + $0x74] sm:$0xf] %v1564
    %1693 = vst [vmem:[#allocation7 + $0x78] sm:$0xf] %v1565
    %1694 = vst [vmem:[#allocation7 + $0x7c] sm:$0xf] %v1566
    %1695 = vst [vmem:[#allocation7 + $0x80] sm:$0xf] %v1567
    %1696 = vst [vmem:[#allocation7 + $0x84] sm:$0xf] %v1568
    %1697 = vst [vmem:[#allocation7 + $0x88] sm:$0xf] %v1569
    %1698 = vst [vmem:[#allocation7 + $0x8c] sm:$0xf] %v1570
    %1699 = vst [vmem:[#allocation7 + $0x90] sm:$0xf] %v1571
    %1700 = vst [vmem:[#allocation7 + $0x94] sm:$0xf] %v1572
    %1701 = vst [vmem:[#allocation7 + $0x98] sm:$0xf] %v1573
    %1702 = vst [vmem:[#allocation7 + $0x9c] sm:$0xf] %v1574
    %1703 = vst [vmem:[#allocation7 + $0xa0] sm:$0xf] %v1575
    %1704 = vst [vmem:[#allocation7 + $0xa4] sm:$0xf] %v1576
    %1705 = vst [vmem:[#allocation7 + $0xa8] sm:$0xf] %v1577
    %1706 = vst [vmem:[#allocation7 + $0xac] sm:$0xf] %v1578
    %1707 = vst [vmem:[#allocation7 + $0xb0] sm:$0xf] %v1579
    %1708 = vst [vmem:[#allocation7 + $0xb4] sm:$0xf] %v1580
    %1709 = vst [vmem:[#allocation7 + $0xb8] sm:$0xf] %v1581
    %1710 = vst [vmem:[#allocation7 + $0xbc] sm:$0xf] %v1582
    %1711 = vst [vmem:[#allocation7 + $0xc0] sm:$0xf] %v1583
    %1712 = vst [vmem:[#allocation7 + $0xc4] sm:$0xf] %v1584
    %1713 = vst [vmem:[#allocation7 + $0xc8] sm:$0xf] %v1585
    %1714 = vst [vmem:[#allocation7 + $0xcc] sm:$0xf] %v1586
    %1715 = vst [vmem:[#allocation7 + $0xd0] sm:$0xf] %v1587
    %1716 = vst [vmem:[#allocation7 + $0xd4] sm:$0xf] %v1588
    %1717 = vst [vmem:[#allocation7 + $0xd8] sm:$0xf] %v1589
    %1718 = vst [vmem:[#allocation7 + $0xdc] sm:$0xf] %v1590
    %1719 = vst [vmem:[#allocation7 + $0xe0] sm:$0xf] %v1591
    %1720 = vst [vmem:[#allocation7 + $0xe4] sm:$0xf] %v1592
    %1721 = vst [vmem:[#allocation7 + $0xe8] sm:$0xf] %v1593
    %1722 = vst [vmem:[#allocation7 + $0xec] sm:$0xf] %v1594
    %1723 = vst [vmem:[#allocation7 + $0xf0] sm:$0xf] %v1595
    %1724 = vst [vmem:[#allocation7 + $0xf4] sm:$0xf] %v1596
    %1725 = vst [vmem:[#allocation7 + $0xf8] sm:$0xf] %v1597
    %1726 = vst [vmem:[#allocation7 + $0xfc] sm:$0xf] %v1598
    // Predicated region
    $region26: #{tpu_custom_call.1} parent=1 // pred_check
      _
    $region27: #{tpu_custom_call.1} parent=1 // pred_check_branch
      %1728 = sbr.rel (0) target = $region29
    $region28: #{tpu_custom_call.1} parent=1 // pred_region
      %s1730 = ssub.s32 4096, 4096
      %1731 = vsyncadd [#allocation4], %s1730
      %s1732 = sshll.u32 [#allocation7], 4
      %s1733 = int_to_ptr.vmem [resolvable:$true] %s1732
      %1738 = dma.vmem_to_hbm [thread:$0]  %s1733, 4096, %s4, [#allocation4], 64, 64, 4
    $region29: #{tpu_custom_call.1} parent=1 // pred_fallthru
      _
    // Predicated region
    $region30: #{tpu_custom_call.1} parent=1 // pred_check
      _
    $region31: #{tpu_custom_call.1} parent=1 // pred_check_branch
      %1740 = sbr.rel (0) target = $region33
    $region32: #{tpu_custom_call.1} parent=1 // pred_region
      %1741 = dma.done [#allocation4], 4096
    $region33: #{tpu_custom_call.1} parent=1 // pred_fallthru
      _
    %1742 = vsyncpa [#allocation3], 1
    %1743 = vsyncpa [#allocation6], 1
    %1744 = vsyncpa [#allocation4], 1

</llo_original>
